<compile_context>
chip_gen: v6e
topology: v6e:2x2x1
jax: 0.10.0
libtpu: 0.0.40
codegen_flags: <defaults>
</compile_context>

<pallas_src>
import functools

import jax
import jax.numpy as jnp
from jax.experimental import pallas as pl
from jax.experimental.pallas import tpu as pltpu

_LANE = 128     # TPU vreg lane width
_SUBLANE = 8    # TPU vreg sublane width


def _round_up(n, m):
    return ((n + m - 1) // m) * m


# ---------------------------------------------------------------------------
# Fused encoder + decoder MLP (one batch tile per grid step)
#   h1    = relu(x  @ W1 + b1)        (TB, DP) -> (TB, HP)
#   codes = h1 @ W2 + b2              (TB, HP) -> (TB, LP)   [encode_mu]
#   h2    = relu(codes @ W3 + b3)     (TB, LP) -> (TB, HP)
#   out   = h2 @ W4 + b4              (TB, HP) -> (TB, DP)   [decode]
#   out   = sigmoid(out) if activate                          (GenerativeAE.act)
# Weights are bf16 and zero-padded to lane width; padding columns carry zero
# bias and zero next-layer weights, so padding contributes nothing to the
# unpadded slice.  All accumulation is f32 on the MXU.
# ---------------------------------------------------------------------------
def _hybrid_ae_kernel(x_ref, w1_ref, b1_ref, w2_ref, b2_ref,
                      w3_ref, b3_ref, w4_ref, b4_ref,
                      out_ref, *, activate: bool):
    # Cast to bf16 in-kernel (VPU has slack); avoids a wrapper-side cast pass.
    x = x_ref[...].astype(jnp.bfloat16)                     # (TB, DP)

    h1 = jnp.dot(x, w1_ref[...], preferred_element_type=jnp.float32)
    h1 = jnp.maximum(h1 + b1_ref[...], 0.0).astype(jnp.bfloat16)

    codes = jnp.dot(h1, w2_ref[...], preferred_element_type=jnp.float32)
    codes = (codes + b2_ref[...]).astype(jnp.bfloat16)       # kept in-register

    h2 = jnp.dot(codes, w3_ref[...], preferred_element_type=jnp.float32)
    h2 = jnp.maximum(h2 + b3_ref[...], 0.0).astype(jnp.bfloat16)

    out = jnp.dot(h2, w4_ref[...], preferred_element_type=jnp.float32)
    out = out + b4_ref[...]
    if activate:  # static specialization of nn.Sigmoid
        out = jax.nn.sigmoid(out)

    out_ref[...] = out.astype(out_ref.dtype)                 # lane-dense (TB, DP)


def _pad2(a, rows, cols):
    return jnp.pad(a, ((0, rows - a.shape[0]), (0, cols - a.shape[1])))


def prepare_params(params, D):
    """One-time pad-to-lane-width + bf16 cast of the MLP weights (off the hot path)."""
    w1, b1, w2, b2, w3, b3, w4, b4 = params
    Hdim, L = w1.shape[1], w2.shape[1]
    DP = _round_up(D, _LANE)
    HP = _round_up(Hdim, _LANE)
    LP = _round_up(L, _LANE)
    return dict(
        w1=_pad2(w1, DP, HP).astype(jnp.bfloat16), b1=_pad2(b1, 1, HP).astype(jnp.float32),
        w2=_pad2(w2, HP, LP).astype(jnp.bfloat16), b2=_pad2(b2, 1, LP).astype(jnp.float32),
        w3=_pad2(w3, LP, HP).astype(jnp.bfloat16), b3=_pad2(b3, 1, HP).astype(jnp.float32),
        w4=_pad2(w4, HP, DP).astype(jnp.bfloat16), b4=_pad2(b4, 1, DP).astype(jnp.float32),
        dims=(D, DP, HP, LP))


def _device_budget():
    """(batch-tile cap, vmem_limit_bytes) per TPU generation."""
    try:
        kind = jax.devices()[0].device_kind.lower()
    except Exception:  # pragma: no cover - defensive
        kind = ""
    if "v7" in kind:                       # 64 MiB VMEM per TensorCore
        return 512, 40 << 20
    if any(v in kind for v in ("v4", "v5", "v6")):   # 128 MiB physical VMEM
        return 1024, 96 << 20
    return 512, 32 << 20                   # conservative default


def _choose_batch_tiling(B, tb_cap):
    """Pick a sublane-aligned batch tile; aim for >=2 (even) grid steps so the
    parallel batch axis can shard across v7x's two TensorCores."""
    nb = max(2, -(-B // tb_cap))
    if nb % 2:
        nb += 1
    tb = max(_SUBLANE, _round_up(-(-B // nb), _SUBLANE))
    tb = min(tb, _round_up(B, _SUBLANE))
    nb = -(-B // tb)        # actual number of grid steps (last block may be ragged)
    return tb, nb


def hybrid_ae_forward(x_nchw, prepared, *, activate: bool = False, tb: int = None):
    """HybridAE.forward; returns [output] (NCHW) like the torch module."""
    B, C, H, W = x_nchw.shape
    D, DP, HP, LP = prepared["dims"]
    assert D == C * H * W, "prepared params do not match input shape"

    x_flat = x_nchw.reshape(B, D)              # torch-style .view(B, -1) flatten
    if DP != D:                                # keep the lane axis dense
        x_flat = jnp.pad(x_flat, ((0, 0), (0, DP - D)))

    tb_cap, vmem_limit = _device_budget()
    if tb is None:
        tb, nb = _choose_batch_tiling(B, tb_cap)
    else:
        tb = max(_SUBLANE, _round_up(tb, _SUBLANE))
        nb = pl.cdiv(B, tb)

    out_dtype = x_nchw.dtype                   # bf16 in -> bf16 out; f32 in -> f32 out

    def resident(shape):                       # constant index_map: stays in VMEM
        return pl.BlockSpec(shape, lambda i: (0, 0))

    flops = 2 * B * (DP * HP + HP * LP + LP * HP + HP * DP)
    bytes_accessed = int(
        x_flat.size * x_flat.dtype.itemsize
        + B * DP * jnp.dtype(out_dtype).itemsize
        + sum(prepared[k].size for k in ("w1", "w2", "w3", "w4")) * 2
        + sum(prepared[k].size for k in ("b1", "b2", "b3", "b4")) * 4)

    out = pl.pallas_call(
        functools.partial(_hybrid_ae_kernel, activate=activate),
        out_shape=jax.ShapeDtypeStruct((B, DP), out_dtype),
        grid=(nb,),
        in_specs=[
            pl.BlockSpec((tb, DP), lambda i: (i, 0)),     # x: tiled over batch
            resident((DP, HP)), resident((1, HP)),        # W1, b1
            resident((HP, LP)), resident((1, LP)),        # W2, b2
            resident((LP, HP)), resident((1, HP)),        # W3, b3
            resident((HP, DP)), resident((1, DP)),        # W4, b4
        ],
        out_specs=pl.BlockSpec((tb, DP), lambda i: (i, 0)),
        compiler_params=pltpu.CompilerParams(
            dimension_semantics=("parallel",),            # megacore on v7x
            vmem_limit_bytes=vmem_limit),
        cost_estimate=pl.CostEstimate(
            flops=flops,
            transcendentals=2 * B * DP if activate else 0,  # sigmoid = exp + recip
            bytes_accessed=bytes_accessed),
    )(x_flat, prepared["w1"], prepared["b1"], prepared["w2"], prepared["b2"],
      prepared["w3"], prepared["b3"], prepared["w4"], prepared["b4"])

    output = out[:, :D].reshape(B, C, H, W)
    return [output]


def init_params(key, D, Hdim, L):
    """Deterministic parameter init (shapes implied by the MLP enc/dec)."""
    ks = jax.random.split(key, 4)
    scale = lambda fan_in: 1.0 / jnp.sqrt(jnp.float32(fan_in))
    w1 = jax.random.normal(ks[0], (D, Hdim), jnp.float32) * scale(D)
    b1 = jnp.zeros((1, Hdim), jnp.float32)
    w2 = jax.random.normal(ks[1], (Hdim, L), jnp.float32) * scale(Hdim)
    b2 = jnp.zeros((1, L), jnp.float32)
    w3 = jax.random.normal(ks[2], (L, Hdim), jnp.float32) * scale(L)
    b3 = jnp.zeros((1, Hdim), jnp.float32)
    w4 = jax.random.normal(ks[3], (Hdim, D), jnp.float32) * scale(Hdim)
    b4 = jnp.zeros((1, D), jnp.float32)
    return (w1, b1, w2, b2, w3, b3, w4, b4)


if __name__ == "__main__":
    # params analogue: latent_size=8, unit_dim=1, latent_vecs=16 (N unused on
    # the forward path), hidden width 32.
    B, C, H, W = 2, 4, 16, 16
    D = C * H * W
    Hdim = 32
    latent_size = 8

    key = jax.random.PRNGKey(0)
    k_x, k_p = jax.random.split(key)
    x = jax.random.normal(k_x, (B, C, H, W), jnp.float32)
    raw = init_params(k_p, D, Hdim, latent_size)
    prepared = prepare_params(raw, D)          # one-time pad/cast, off the hot path

    out = jax.block_until_ready(hybrid_ae_forward(x, prepared, activate=False)[0])
    assert out.shape == (B, C, H, W)
    assert out.dtype == x.dtype

    # Pure-JAX f32 reference; kernel uses bf16 MXU operands, so tolerance-check.
    def ref(xf):
        w1, b1, w2, b2, w3, b3, w4, b4 = raw
        h1 = jnp.maximum(xf.reshape(B, D) @ w1 + b1, 0.0)
        c = h1 @ w2 + b2
        h2 = jnp.maximum(c @ w3 + b3, 0.0)
        return (h2 @ w4 + b4).reshape(B, C, H, W)

    r = ref(x)
    max_err = float(jnp.max(jnp.abs(out - r)))
    assert max_err < 0.1, f"max abs err vs f32 reference: {max_err}"

    # Also exercise the activated (sigmoid) path once, as reconstruct() would.
    out_act = jax.block_until_ready(
        hybrid_ae_forward(x, prepared, activate=True)[0])
    assert out_act.shape == (B, C, H, W)
    assert bool(jnp.all((out_act >= 0.0) & (out_act <= 1.0)))

    print("KERNEL_OK")
</pallas_src>

<mosaic_0001>
module attributes {stable_mosaic.version = 11 : i64} {
  func.func @_hybrid_ae_kernel(%arg0: i32, %arg1: memref<8x1024xf32, #tpu.memory_space<vmem>>, %arg2: memref<1024x128xbf16, #tpu.memory_space<vmem>>, %arg3: memref<1x128xf32, #tpu.memory_space<vmem>>, %arg4: memref<128x128xbf16, #tpu.memory_space<vmem>>, %arg5: memref<1x128xf32, #tpu.memory_space<vmem>>, %arg6: memref<128x128xbf16, #tpu.memory_space<vmem>>, %arg7: memref<1x128xf32, #tpu.memory_space<vmem>>, %arg8: memref<128x1024xbf16, #tpu.memory_space<vmem>>, %arg9: memref<1x1024xf32, #tpu.memory_space<vmem>>, %arg10: memref<8x1024xf32, #tpu.memory_space<vmem>>) attributes {dimension_semantics = [#tpu.dimension_semantics<parallel>], iteration_bounds = array<i64: 1>, scalar_prefetch = 0 : i64, scratch_operands = 0 : i64, tpu.core_type = #tpu.core_type<tc>, window_params = [{transform_indices = @transform_0, window_bounds = array<i64: 8, 1024>}, {pipeline_mode = #tpu.pipeline_mode<synchronous>, transform_indices = @transform_1, window_bounds = array<i64: 1024, 128>}, {pipeline_mode = #tpu.pipeline_mode<synchronous>, transform_indices = @transform_2, window_bounds = array<i64: 1, 128>}, {pipeline_mode = #tpu.pipeline_mode<synchronous>, transform_indices = @transform_3, window_bounds = array<i64: 128, 128>}, {pipeline_mode = #tpu.pipeline_mode<synchronous>, transform_indices = @transform_4, window_bounds = array<i64: 1, 128>}, {pipeline_mode = #tpu.pipeline_mode<synchronous>, transform_indices = @transform_5, window_bounds = array<i64: 128, 128>}, {pipeline_mode = #tpu.pipeline_mode<synchronous>, transform_indices = @transform_6, window_bounds = array<i64: 1, 128>}, {pipeline_mode = #tpu.pipeline_mode<synchronous>, transform_indices = @transform_7, window_bounds = array<i64: 128, 1024>}, {pipeline_mode = #tpu.pipeline_mode<synchronous>, transform_indices = @transform_8, window_bounds = array<i64: 1, 1024>}, {transform_indices = @transform_9, window_bounds = array<i64: 8, 1024>}]} {
    %c0 = arith.constant 0 : index
    %c0_0 = arith.constant 0 : index
    %0 = vector.load %arg1[%c0, %c0_0] : memref<8x1024xf32, #tpu.memory_space<vmem>>, vector<8x1024xf32>
    %1 = arith.truncf %0 : vector<8x1024xf32> to vector<8x1024xbf16>
    %c0_1 = arith.constant 0 : index
    %c0_2 = arith.constant 0 : index
    %2 = vector.load %arg2[%c0_1, %c0_2] : memref<1024x128xbf16, #tpu.memory_space<vmem>>, vector<1024x128xbf16>
    %cst = arith.constant dense<0.000000e+00> : vector<8x128xf32>
    %3 = tpu.matmul %1, %2, %cst {dimension_numbers = #tpu.dot_dimension_numbers<[1], [0], [0], [1], [0, 0, 1, 1], [], []>} : vector<8x1024xbf16>, vector<1024x128xbf16>, vector<8x128xf32> -> vector<8x128xf32>
    %c0_3 = arith.constant 0 : index
    %c0_4 = arith.constant 0 : index
    %4 = vector.load %arg3[%c0_3, %c0_4] : memref<1x128xf32, #tpu.memory_space<vmem>>, vector<1x128xf32>
    %5 = vector.broadcast %4 : vector<1x128xf32> to vector<8x128xf32>
    %6 = arith.addf %3, %5 : vector<8x128xf32>
    %cst_5 = arith.constant 0.000000e+00 : f32
    %7 = vector.broadcast %cst_5 : f32 to vector<8x128xf32>
    %8 = arith.maximumf %6, %7 : vector<8x128xf32>
    %9 = arith.truncf %8 : vector<8x128xf32> to vector<8x128xbf16>
    %c0_6 = arith.constant 0 : index
    %c0_7 = arith.constant 0 : index
    %10 = vector.load %arg4[%c0_6, %c0_7] : memref<128x128xbf16, #tpu.memory_space<vmem>>, vector<128x128xbf16>
    %cst_8 = arith.constant dense<0.000000e+00> : vector<8x128xf32>
    %11 = tpu.matmul %9, %10, %cst_8 {dimension_numbers = #tpu.dot_dimension_numbers<[1], [0], [0], [1], [0, 0, 1, 1], [], []>} : vector<8x128xbf16>, vector<128x128xbf16>, vector<8x128xf32> -> vector<8x128xf32>
    %c0_9 = arith.constant 0 : index
    %c0_10 = arith.constant 0 : index
    %12 = vector.load %arg5[%c0_9, %c0_10] : memref<1x128xf32, #tpu.memory_space<vmem>>, vector<1x128xf32>
    %13 = vector.broadcast %12 : vector<1x128xf32> to vector<8x128xf32>
    %14 = arith.addf %11, %13 : vector<8x128xf32>
    %15 = arith.truncf %14 : vector<8x128xf32> to vector<8x128xbf16>
    %c0_11 = arith.constant 0 : index
    %c0_12 = arith.constant 0 : index
    %16 = vector.load %arg6[%c0_11, %c0_12] : memref<128x128xbf16, #tpu.memory_space<vmem>>, vector<128x128xbf16>
    %cst_13 = arith.constant dense<0.000000e+00> : vector<8x128xf32>
    %17 = tpu.matmul %15, %16, %cst_13 {dimension_numbers = #tpu.dot_dimension_numbers<[1], [0], [0], [1], [0, 0, 1, 1], [], []>} : vector<8x128xbf16>, vector<128x128xbf16>, vector<8x128xf32> -> vector<8x128xf32>
    %c0_14 = arith.constant 0 : index
    %c0_15 = arith.constant 0 : index
    %18 = vector.load %arg7[%c0_14, %c0_15] : memref<1x128xf32, #tpu.memory_space<vmem>>, vector<1x128xf32>
    %19 = vector.broadcast %18 : vector<1x128xf32> to vector<8x128xf32>
    %20 = arith.addf %17, %19 : vector<8x128xf32>
    %cst_16 = arith.constant 0.000000e+00 : f32
    %21 = vector.broadcast %cst_16 : f32 to vector<8x128xf32>
    %22 = arith.maximumf %20, %21 : vector<8x128xf32>
    %23 = arith.truncf %22 : vector<8x128xf32> to vector<8x128xbf16>
    %c0_17 = arith.constant 0 : index
    %c0_18 = arith.constant 0 : index
    %24 = vector.load %arg8[%c0_17, %c0_18] : memref<128x1024xbf16, #tpu.memory_space<vmem>>, vector<128x1024xbf16>
    %cst_19 = arith.constant dense<0.000000e+00> : vector<8x1024xf32>
    %25 = tpu.matmul %23, %24, %cst_19 {dimension_numbers = #tpu.dot_dimension_numbers<[1], [0], [0], [1], [0, 0, 1, 1], [], []>} : vector<8x128xbf16>, vector<128x1024xbf16>, vector<8x1024xf32> -> vector<8x1024xf32>
    %c0_20 = arith.constant 0 : index
    %c0_21 = arith.constant 0 : index
    %26 = vector.load %arg9[%c0_20, %c0_21] : memref<1x1024xf32, #tpu.memory_space<vmem>>, vector<1x1024xf32>
    %27 = vector.broadcast %26 : vector<1x1024xf32> to vector<8x1024xf32>
    %28 = arith.addf %25, %27 : vector<8x1024xf32>
    %c0_22 = arith.constant 0 : index
    %c0_23 = arith.constant 0 : index
    %29 = vector.load %arg10[%c0_22, %c0_23] : memref<8x1024xf32, #tpu.memory_space<vmem>>, vector<8x1024xf32>
    tpu.vector_store %arg10[%c0_22, %c0_23], %28 {strides = array<i32>} : memref<8x1024xf32, #tpu.memory_space<vmem>>, vector<8x1024xf32>,
    return
  }
  func.func @transform_0(%arg0: i32) -> (i32, i32) {
    %c0_i32 = arith.constant 0 : i32
    %c0_i32_0 = arith.constant 0 : i32
    return %arg0, %c0_i32 : i32, i32
  }
  func.func @transform_1(%arg0: i32) -> (i32, i32) {
    %c0_i32 = arith.constant 0 : i32
    %c0_i32_0 = arith.constant 0 : i32
    %c0_i32_1 = arith.constant 0 : i32
    return %c0_i32, %c0_i32_0 : i32, i32
  }
  func.func @transform_2(%arg0: i32) -> (i32, i32) {
    %c0_i32 = arith.constant 0 : i32
    %c0_i32_0 = arith.constant 0 : i32
    %c0_i32_1 = arith.constant 0 : i32
    return %c0_i32, %c0_i32_0 : i32, i32
  }
  func.func @transform_3(%arg0: i32) -> (i32, i32) {
    %c0_i32 = arith.constant 0 : i32
    %c0_i32_0 = arith.constant 0 : i32
    %c0_i32_1 = arith.constant 0 : i32
    return %c0_i32, %c0_i32_0 : i32, i32
  }
  func.func @transform_4(%arg0: i32) -> (i32, i32) {
    %c0_i32 = arith.constant 0 : i32
    %c0_i32_0 = arith.constant 0 : i32
    %c0_i32_1 = arith.constant 0 : i32
    return %c0_i32, %c0_i32_0 : i32, i32
  }
  func.func @transform_5(%arg0: i32) -> (i32, i32) {
    %c0_i32 = arith.constant 0 : i32
    %c0_i32_0 = arith.constant 0 : i32
    %c0_i32_1 = arith.constant 0 : i32
    return %c0_i32, %c0_i32_0 : i32, i32
  }
  func.func @transform_6(%arg0: i32) -> (i32, i32) {
    %c0_i32 = arith.constant 0 : i32
    %c0_i32_0 = arith.constant 0 : i32
    %c0_i32_1 = arith.constant 0 : i32
    return %c0_i32, %c0_i32_0 : i32, i32
  }
  func.func @transform_7(%arg0: i32) -> (i32, i32) {
    %c0_i32 = arith.constant 0 : i32
    %c0_i32_0 = arith.constant 0 : i32
    %c0_i32_1 = arith.constant 0 : i32
    return %c0_i32, %c0_i32_0 : i32, i32
  }
  func.func @transform_8(%arg0: i32) -> (i32, i32) {
    %c0_i32 = arith.constant 0 : i32
    %c0_i32_0 = arith.constant 0 : i32
    %c0_i32_1 = arith.constant 0 : i32
    return %c0_i32, %c0_i32_0 : i32, i32
  }
  func.func @transform_9(%arg0: i32) -> (i32, i32) {
    %c0_i32 = arith.constant 0 : i32
    %c0_i32_0 = arith.constant 0 : i32
    return %arg0, %c0_i32 : i32, i32
  }
}

</mosaic_0001>

<llo_original>
// kernel: tpu_custom_call.1
$region0: #{tpu_custom_call.1}
  #allocation0 [shape = 'u32[]', space=smem, size = 0x4, offset = 0x4, fixed_abs, tag = 'smem constant byte address 0x4 - core index']
  #allocation1 [shape = 'u32[144,128]{1,0:T(1,128)}', space=vmem, size = 0x12000, scoped, tag = 'internal scratch']
  %s0 = inlined_call_operand.hbm [shape: f32[2,1024], index: 0, kind: input, shape index: {}]
  %s1 = inlined_call_operand.hbm [shape: bf16[1024,128], index: 1, kind: input, shape index: {}]
  %s2 = inlined_call_operand.vmem [shape: f32[1,128], index: 2, kind: input, shape index: {}]
  %s3 = inlined_call_operand.hbm [shape: bf16[128,128], index: 3, kind: input, shape index: {}]
  %s4 = inlined_call_operand.vmem [shape: f32[1,128], index: 4, kind: input, shape index: {}]
  %s5 = inlined_call_operand.hbm [shape: bf16[128,128], index: 5, kind: input, shape index: {}]
  %s6 = inlined_call_operand.vmem [shape: f32[1,128], index: 6, kind: input, shape index: {}]
  %s7 = inlined_call_operand.hbm [shape: bf16[128,1024], index: 7, kind: input, shape index: {}]
  %s8 = inlined_call_operand.vmem [shape: f32[1,1024], index: 8, kind: input, shape index: {}]
  %s9 = inlined_call_operand.hbm [shape: f32[2,1024], index: 9, kind: output, shape index: {}]
  %s10 = sld [smem:[#allocation0]]
  $region66: #{tpu_custom_call.1} parent=0
    _
  %s12 = ssub.s32 1, %s10
  %s13 = scalar_select 0, %s12, %s10
  $region1: #{tpu_custom_call.1} parent=0
    #allocation2 [shape = 'u8[32768]{0}', space=vmem, size = 0x8000, scoped, tag = 'input window, operand 0, single buffered']
    #allocation3 [shape = 's32[1]{0}', space=sflag, size = 0x4, scoped, tag = 'scoped memory for tpu_custom_call.1']
    #allocation4 [shape = 's32[1]{0}', space=sflag, size = 0x4, scoped, tag = 'scoped memory for tpu_custom_call.1']
    #allocation5 [shape = 'u8[262144]{0}', space=vmem, size = 0x40000, scoped, tag = 'input window, operand 1, single buffered']
    #allocation6 [shape = 's32[1]{0}', space=sflag, size = 0x4, scoped, tag = 'scoped memory for tpu_custom_call.1']
    #allocation7 [shape = 'u8[32768]{0}', space=vmem, size = 0x8000, scoped, tag = 'input window, operand 3, single buffered']
    #allocation8 [shape = 'u8[32768]{0}', space=vmem, size = 0x8000, scoped, tag = 'input window, operand 5, single buffered']
    #allocation9 [shape = 's32[1]{0}', space=sflag, size = 0x4, scoped, tag = 'scoped memory for tpu_custom_call.1']
    #allocation10 [shape = 'u8[262144]{0}', space=vmem, size = 0x40000, scoped, tag = 'input window, operand 7, single buffered']
    #allocation11 [shape = 'u8[32768]{0}', space=vmem, size = 0x8000, scoped, tag = 'output window, operand 0, single buffered']
    %14 = vsyncpa [#allocation3], 0
    %15 = vsyncpa [#allocation6], 0
    %16 = vsyncpa [#allocation9], 0
    %17 = vsyncpa [#allocation4], 0
    // Predicated region
    $region2: #{tpu_custom_call.1} parent=1 // pred_check
      _
    $region3: #{tpu_custom_call.1} parent=1 // pred_check_branch
      %19 = sbr.rel (0) target = $region5
    $region4: #{tpu_custom_call.1} parent=1 // pred_region
      %s21 = ssub.s32 1024, 256
      %22 = vsyncadd [#allocation3], %s21
      %s23 = sshll.u32 [#allocation2], 4
      %s24 = int_to_ptr.vmem [resolvable:$true] %s23
      %29 = dma.hbm_to_vmem [thread:$0]  %s0, 256, %s24, [#allocation3], 256, 256, 16
    $region5: #{tpu_custom_call.1} parent=1 // pred_fallthru
      _
    // Predicated region
    $region6: #{tpu_custom_call.1} parent=1 // pred_check
      _
    $region7: #{tpu_custom_call.1} parent=1 // pred_check_branch
      %31 = sbr.rel (0) target = $region9
    $region8: #{tpu_custom_call.1} parent=1 // pred_region
      %s33 = ssub.s32 8192, 8192
      %34 = vsyncadd [#allocation6], %s33
      %s35 = sshll.u32 [#allocation5], 4
      %s36 = int_to_ptr.vmem [resolvable:$true] %s35
      %41 = dma.hbm_to_vmem [thread:$0]  %s1, 8192, %s36, [#allocation6], 64, 64, 4
    $region9: #{tpu_custom_call.1} parent=1 // pred_fallthru
      _
    // Predicated region
    $region10: #{tpu_custom_call.1} parent=1 // pred_check
      _
    $region11: #{tpu_custom_call.1} parent=1 // pred_check_branch
      %43 = sbr.rel (0) target = $region13
    $region12: #{tpu_custom_call.1} parent=1 // pred_region
      _
    $region13: #{tpu_custom_call.1} parent=1 // pred_fallthru
      _
    // Predicated region
    $region14: #{tpu_custom_call.1} parent=1 // pred_check
      _
    $region15: #{tpu_custom_call.1} parent=1 // pred_check_branch
      %45 = sbr.rel (0) target = $region17
    $region16: #{tpu_custom_call.1} parent=1 // pred_region
      %s47 = ssub.s32 1024, 1024
      %48 = vsyncadd [#allocation6], %s47
      %s49 = sshll.u32 [#allocation7], 4
      %s50 = int_to_ptr.vmem [resolvable:$true] %s49
      %55 = dma.hbm_to_vmem [thread:$0]  %s3, 1024, %s50, [#allocation6], 64, 64, 4
    $region17: #{tpu_custom_call.1} parent=1 // pred_fallthru
      _
    // Predicated region
    $region18: #{tpu_custom_call.1} parent=1 // pred_check
      _
    $region19: #{tpu_custom_call.1} parent=1 // pred_check_branch
      %57 = sbr.rel (0) target = $region21
    $region20: #{tpu_custom_call.1} parent=1 // pred_region
      _
    $region21: #{tpu_custom_call.1} parent=1 // pred_fallthru
      _
    // Predicated region
    $region22: #{tpu_custom_call.1} parent=1 // pred_check
      _
    $region23: #{tpu_custom_call.1} parent=1 // pred_check_branch
      %59 = sbr.rel (0) target = $region25
    $region24: #{tpu_custom_call.1} parent=1 // pred_region
      %s61 = ssub.s32 1024, 1024
      %62 = vsyncadd [#allocation9], %s61
      %s63 = sshll.u32 [#allocation8], 4
      %s64 = int_to_ptr.vmem [resolvable:$true] %s63
      %69 = dma.hbm_to_vmem [thread:$0]  %s5, 1024, %s64, [#allocation9], 64, 64, 4
    $region25: #{tpu_custom_call.1} parent=1 // pred_fallthru
      _
    // Predicated region
    $region26: #{tpu_custom_call.1} parent=1 // pred_check
      _
    $region27: #{tpu_custom_call.1} parent=1 // pred_check_branch
      %71 = sbr.rel (0) target = $region29
    $region28: #{tpu_custom_call.1} parent=1 // pred_region
      _
    $region29: #{tpu_custom_call.1} parent=1 // pred_fallthru
      _
    // Predicated region
    $region30: #{tpu_custom_call.1} parent=1 // pred_check
      _
    $region31: #{tpu_custom_call.1} parent=1 // pred_check_branch
      %73 = sbr.rel (0) target = $region33
    $region32: #{tpu_custom_call.1} parent=1 // pred_region
      %s75 = ssub.s32 8192, 8192
      %76 = vsyncadd [#allocation9], %s75
      %s77 = sshll.u32 [#allocation10], 4
      %s78 = int_to_ptr.vmem [resolvable:$true] %s77
      %83 = dma.hbm_to_vmem [thread:$0]  %s7, 8192, %s78, [#allocation9], 512, 512, 32
    $region33: #{tpu_custom_call.1} parent=1 // pred_fallthru
      _
    // Predicated region
    $region34: #{tpu_custom_call.1} parent=1 // pred_check
      _
    $region35: #{tpu_custom_call.1} parent=1 // pred_check_branch
      %85 = sbr.rel (0) target = $region37
    $region36: #{tpu_custom_call.1} parent=1 // pred_region
      _
    $region37: #{tpu_custom_call.1} parent=1 // pred_fallthru
      _
    // Predicated region
    $region38: #{tpu_custom_call.1} parent=1 // pred_check
      _
    $region39: #{tpu_custom_call.1} parent=1 // pred_check_branch
      %87 = sbr.rel (0) target = $region41
    $region40: #{tpu_custom_call.1} parent=1 // pred_region
      %88 = dma.done [#allocation3], 1024
    $region41: #{tpu_custom_call.1} parent=1 // pred_fallthru
      _
    // Predicated region
    $region42: #{tpu_custom_call.1} parent=1 // pred_check
      _
    $region43: #{tpu_custom_call.1} parent=1 // pred_check_branch
      %90 = sbr.rel (0) target = $region45
    $region44: #{tpu_custom_call.1} parent=1 // pred_region
      %91 = dma.done [#allocation6], 8192
    $region45: #{tpu_custom_call.1} parent=1 // pred_fallthru
      _
    // Predicated region
    $region46: #{tpu_custom_call.1} parent=1 // pred_check
      _
    $region47: #{tpu_custom_call.1} parent=1 // pred_check_branch
      %93 = sbr.rel (0) target = $region49
    $region48: #{tpu_custom_call.1} parent=1 // pred_region
      %94 = dma.done [#allocation6], 1024
    $region49: #{tpu_custom_call.1} parent=1 // pred_fallthru
      _
    // Predicated region
    $region50: #{tpu_custom_call.1} parent=1 // pred_check
      _
    $region51: #{tpu_custom_call.1} parent=1 // pred_check_branch
      %96 = sbr.rel (0) target = $region53
    $region52: #{tpu_custom_call.1} parent=1 // pred_region
      %97 = dma.done [#allocation9], 1024
    $region53: #{tpu_custom_call.1} parent=1 // pred_fallthru
      _
    // Predicated region
    $region54: #{tpu_custom_call.1} parent=1 // pred_check
      _
    $region55: #{tpu_custom_call.1} parent=1 // pred_check_branch
      %99 = sbr.rel (0) target = $region57
    $region56: #{tpu_custom_call.1} parent=1 // pred_region
      %100 = dma.done [#allocation9], 8192
    $region57: #{tpu_custom_call.1} parent=1 // pred_fallthru
      _
    %v102 = vld [vmem:[#allocation2] sm:$0xff]
    %v103 = vld [vmem:[#allocation2 + $0x8] sm:$0xff]
    %v104 = vld [vmem:[#allocation2 + $0x10] sm:$0xff]
    %v105 = vld [vmem:[#allocation2 + $0x18] sm:$0xff]
    %v106 = vld [vmem:[#allocation2 + $0x20] sm:$0xff]
    %v107 = vld [vmem:[#allocation2 + $0x28] sm:$0xff]
    %v108 = vld [vmem:[#allocation2 + $0x30] sm:$0xff]
    %v109 = vld [vmem:[#allocation2 + $0x38] sm:$0xff]
    %v118 = vcombine.low %v102, %v104
    %v119 = vcombine.high %v102, %v104
    %v120 = vcombine.low %v106, %v108
    %v121 = vcombine.high %v106, %v108
    %v123 = vunpack.c.l.s4 1983009808
    %v124 = vunpack.c.0.s8 %v123
    %v125 = vlaneseq
    %v126 = vshrl.u32 %v125, 7
    %v127 = vsub.s32 %v124, %v126
    %v128 = vrot.slane %v118, %v127
    %v130 = vunpack.c.l.s4 1983009808
    %v131 = vunpack.c.0.s8 %v130
    %v132 = vlaneseq
    %v133 = vshrl.u32 %v132, 7
    %v134 = vsub.s32 %v131, %v133
    %v135 = vrot.slane %v119, %v134
    %v137 = vunpack.c.l.s4 1983009808
    %v138 = vunpack.c.0.s8 %v137
    %v139 = vlaneseq
    %v140 = vshrl.u32 %v139, 7
    %v141 = vsub.s32 %v138, %v140
    %v142 = vrot.slane %v120, %v141
    %v144 = vunpack.c.l.s4 1983009808
    %v145 = vunpack.c.0.s8 %v144
    %v146 = vlaneseq
    %v147 = vshrl.u32 %v146, 7
    %v148 = vsub.s32 %v145, %v147
    %v149 = vrot.slane %v121, %v148
    %v150 = vcombine.low %v128, %v142
    %v151 = vcombine.high %v128, %v142
    %v152 = vcombine.low %v135, %v149
    %v153 = vcombine.high %v135, %v149
    %v154 = vcombine.low %v103, %v105
    %v155 = vcombine.high %v103, %v105
    %v156 = vcombine.low %v107, %v109
    %v157 = vcombine.high %v107, %v109
    %v159 = vunpack.c.l.s4 1983009808
    %v160 = vunpack.c.0.s8 %v159
    %v161 = vlaneseq
    %v162 = vshrl.u32 %v161, 7
    %v163 = vsub.s32 %v160, %v162
    %v164 = vrot.slane %v154, %v163
    %v166 = vunpack.c.l.s4 1983009808
    %v167 = vunpack.c.0.s8 %v166
    %v168 = vlaneseq
    %v169 = vshrl.u32 %v168, 7
    %v170 = vsub.s32 %v167, %v169
    %v171 = vrot.slane %v155, %v170
    %v173 = vunpack.c.l.s4 1983009808
    %v174 = vunpack.c.0.s8 %v173
    %v175 = vlaneseq
    %v176 = vshrl.u32 %v175, 7
    %v177 = vsub.s32 %v174, %v176
    %v178 = vrot.slane %v156, %v177
    %v180 = vunpack.c.l.s4 1983009808
    %v181 = vunpack.c.0.s8 %v180
    %v182 = vlaneseq
    %v183 = vshrl.u32 %v182, 7
    %v184 = vsub.s32 %v181, %v183
    %v185 = vrot.slane %v157, %v184
    %v186 = vcombine.low %v164, %v178
    %v187 = vcombine.high %v164, %v178
    %v188 = vcombine.low %v171, %v185
    %v189 = vcombine.high %v171, %v185
    %v198 = vpack.c.bf16 %v150, %v150
    %v199 = vpack.c.bf16 %v151, %v151
    %v200 = vpack.c.bf16 %v152, %v152
    %v201 = vpack.c.bf16 %v153, %v153
    %v202 = vpack.c.bf16 %v186, %v186
    %v203 = vpack.c.bf16 %v187, %v187
    %v204 = vpack.c.bf16 %v188, %v188
    %v205 = vpack.c.bf16 %v189, %v189
    %v206 = vld [vmem:[#allocation5] sm:$0xf]
    %v207 = vld [vmem:[#allocation5 + $0x4] sm:$0xf]
    %v208 = vld [vmem:[#allocation5 + $0x8] sm:$0xf]
    %v209 = vld [vmem:[#allocation5 + $0xc] sm:$0xf]
    %v210 = vld [vmem:[#allocation5 + $0x10] sm:$0xf]
    %v211 = vld [vmem:[#allocation5 + $0x14] sm:$0xf]
    %v212 = vld [vmem:[#allocation5 + $0x18] sm:$0xf]
    %v213 = vld [vmem:[#allocation5 + $0x1c] sm:$0xf]
    %v214 = vld [vmem:[#allocation5 + $0x20] sm:$0xf]
    %v215 = vld [vmem:[#allocation5 + $0x24] sm:$0xf]
    %v216 = vld [vmem:[#allocation5 + $0x28] sm:$0xf]
    %v217 = vld [vmem:[#allocation5 + $0x2c] sm:$0xf]
    %v218 = vld [vmem:[#allocation5 + $0x30] sm:$0xf]
    %v219 = vld [vmem:[#allocation5 + $0x34] sm:$0xf]
    %v220 = vld [vmem:[#allocation5 + $0x38] sm:$0xf]
    %v221 = vld [vmem:[#allocation5 + $0x3c] sm:$0xf]
    %v222 = vld [vmem:[#allocation5 + $0x40] sm:$0xf]
    %v223 = vld [vmem:[#allocation5 + $0x44] sm:$0xf]
    %v224 = vld [vmem:[#allocation5 + $0x48] sm:$0xf]
    %v225 = vld [vmem:[#allocation5 + $0x4c] sm:$0xf]
    %v226 = vld [vmem:[#allocation5 + $0x50] sm:$0xf]
    %v227 = vld [vmem:[#allocation5 + $0x54] sm:$0xf]
    %v228 = vld [vmem:[#allocation5 + $0x58] sm:$0xf]
    %v229 = vld [vmem:[#allocation5 + $0x5c] sm:$0xf]
    %v230 = vld [vmem:[#allocation5 + $0x60] sm:$0xf]
    %v231 = vld [vmem:[#allocation5 + $0x64] sm:$0xf]
    %v232 = vld [vmem:[#allocation5 + $0x68] sm:$0xf]
    %v233 = vld [vmem:[#allocation5 + $0x6c] sm:$0xf]
    %v234 = vld [vmem:[#allocation5 + $0x70] sm:$0xf]
    %v235 = vld [vmem:[#allocation5 + $0x74] sm:$0xf]
    %v236 = vld [vmem:[#allocation5 + $0x78] sm:$0xf]
    %v237 = vld [vmem:[#allocation5 + $0x7c] sm:$0xf]
    %v238 = vld [vmem:[#allocation5 + $0x80] sm:$0xf]
    %v239 = vld [vmem:[#allocation5 + $0x84] sm:$0xf]
    %v240 = vld [vmem:[#allocation5 + $0x88] sm:$0xf]
    %v241 = vld [vmem:[#allocation5 + $0x8c] sm:$0xf]
    %v242 = vld [vmem:[#allocation5 + $0x90] sm:$0xf]
    %v243 = vld [vmem:[#allocation5 + $0x94] sm:$0xf]
    %v244 = vld [vmem:[#allocation5 + $0x98] sm:$0xf]
    %v245 = vld [vmem:[#allocation5 + $0x9c] sm:$0xf]
    %v246 = vld [vmem:[#allocation5 + $0xa0] sm:$0xf]
    %v247 = vld [vmem:[#allocation5 + $0xa4] sm:$0xf]
    %v248 = vld [vmem:[#allocation5 + $0xa8] sm:$0xf]
    %v249 = vld [vmem:[#allocation5 + $0xac] sm:$0xf]
    %v250 = vld [vmem:[#allocation5 + $0xb0] sm:$0xf]
    %v251 = vld [vmem:[#allocation5 + $0xb4] sm:$0xf]
    %v252 = vld [vmem:[#allocation5 + $0xb8] sm:$0xf]
    %v253 = vld [vmem:[#allocation5 + $0xbc] sm:$0xf]
    %v254 = vld [vmem:[#allocation5 + $0xc0] sm:$0xf]
    %v255 = vld [vmem:[#allocation5 + $0xc4] sm:$0xf]
    %v256 = vld [vmem:[#allocation5 + $0xc8] sm:$0xf]
    %v257 = vld [vmem:[#allocation5 + $0xcc] sm:$0xf]
    %v258 = vld [vmem:[#allocation5 + $0xd0] sm:$0xf]
    %v259 = vld [vmem:[#allocation5 + $0xd4] sm:$0xf]
    %v260 = vld [vmem:[#allocation5 + $0xd8] sm:$0xf]
    %v261 = vld [vmem:[#allocation5 + $0xdc] sm:$0xf]
    %v262 = vld [vmem:[#allocation5 + $0xe0] sm:$0xf]
    %v263 = vld [vmem:[#allocation5 + $0xe4] sm:$0xf]
    %v264 = vld [vmem:[#allocation5 + $0xe8] sm:$0xf]
    %v265 = vld [vmem:[#allocation5 + $0xec] sm:$0xf]
    %v266 = vld [vmem:[#allocation5 + $0xf0] sm:$0xf]
    %v267 = vld [vmem:[#allocation5 + $0xf4] sm:$0xf]
    %v268 = vld [vmem:[#allocation5 + $0xf8] sm:$0xf]
    %v269 = vld [vmem:[#allocation5 + $0xfc] sm:$0xf]
    %v270 = vld [vmem:[#allocation5 + $0x100] sm:$0xf]
    %v271 = vld [vmem:[#allocation5 + $0x104] sm:$0xf]
    %v272 = vld [vmem:[#allocation5 + $0x108] sm:$0xf]
    %v273 = vld [vmem:[#allocation5 + $0x10c] sm:$0xf]
    %v274 = vld [vmem:[#allocation5 + $0x110] sm:$0xf]
    %v275 = vld [vmem:[#allocation5 + $0x114] sm:$0xf]
    %v276 = vld [vmem:[#allocation5 + $0x118] sm:$0xf]
    %v277 = vld [vmem:[#allocation5 + $0x11c] sm:$0xf]
    %v278 = vld [vmem:[#allocation5 + $0x120] sm:$0xf]
    %v279 = vld [vmem:[#allocation5 + $0x124] sm:$0xf]
    %v280 = vld [vmem:[#allocation5 + $0x128] sm:$0xf]
    %v281 = vld [vmem:[#allocation5 + $0x12c] sm:$0xf]
    %v282 = vld [vmem:[#allocation5 + $0x130] sm:$0xf]
    %v283 = vld [vmem:[#allocation5 + $0x134] sm:$0xf]
    %v284 = vld [vmem:[#allocation5 + $0x138] sm:$0xf]
    %v285 = vld [vmem:[#allocation5 + $0x13c] sm:$0xf]
    %v286 = vld [vmem:[#allocation5 + $0x140] sm:$0xf]
    %v287 = vld [vmem:[#allocation5 + $0x144] sm:$0xf]
    %v288 = vld [vmem:[#allocation5 + $0x148] sm:$0xf]
    %v289 = vld [vmem:[#allocation5 + $0x14c] sm:$0xf]
    %v290 = vld [vmem:[#allocation5 + $0x150] sm:$0xf]
    %v291 = vld [vmem:[#allocation5 + $0x154] sm:$0xf]
    %v292 = vld [vmem:[#allocation5 + $0x158] sm:$0xf]
    %v293 = vld [vmem:[#allocation5 + $0x15c] sm:$0xf]
    %v294 = vld [vmem:[#allocation5 + $0x160] sm:$0xf]
    %v295 = vld [vmem:[#allocation5 + $0x164] sm:$0xf]
    %v296 = vld [vmem:[#allocation5 + $0x168] sm:$0xf]
    %v297 = vld [vmem:[#allocation5 + $0x16c] sm:$0xf]
    %v298 = vld [vmem:[#allocation5 + $0x170] sm:$0xf]
    %v299 = vld [vmem:[#allocation5 + $0x174] sm:$0xf]
    %v300 = vld [vmem:[#allocation5 + $0x178] sm:$0xf]
    %v301 = vld [vmem:[#allocation5 + $0x17c] sm:$0xf]
    %v302 = vld [vmem:[#allocation5 + $0x180] sm:$0xf]
    %v303 = vld [vmem:[#allocation5 + $0x184] sm:$0xf]
    %v304 = vld [vmem:[#allocation5 + $0x188] sm:$0xf]
    %v305 = vld [vmem:[#allocation5 + $0x18c] sm:$0xf]
    %v306 = vld [vmem:[#allocation5 + $0x190] sm:$0xf]
    %v307 = vld [vmem:[#allocation5 + $0x194] sm:$0xf]
    %v308 = vld [vmem:[#allocation5 + $0x198] sm:$0xf]
    %v309 = vld [vmem:[#allocation5 + $0x19c] sm:$0xf]
    %v310 = vld [vmem:[#allocation5 + $0x1a0] sm:$0xf]
    %v311 = vld [vmem:[#allocation5 + $0x1a4] sm:$0xf]
    %v312 = vld [vmem:[#allocation5 + $0x1a8] sm:$0xf]
    %v313 = vld [vmem:[#allocation5 + $0x1ac] sm:$0xf]
    %v314 = vld [vmem:[#allocation5 + $0x1b0] sm:$0xf]
    %v315 = vld [vmem:[#allocation5 + $0x1b4] sm:$0xf]
    %v316 = vld [vmem:[#allocation5 + $0x1b8] sm:$0xf]
    %v317 = vld [vmem:[#allocation5 + $0x1bc] sm:$0xf]
    %v318 = vld [vmem:[#allocation5 + $0x1c0] sm:$0xf]
    %v319 = vld [vmem:[#allocation5 + $0x1c4] sm:$0xf]
    %v320 = vld [vmem:[#allocation5 + $0x1c8] sm:$0xf]
    %v321 = vld [vmem:[#allocation5 + $0x1cc] sm:$0xf]
    %v322 = vld [vmem:[#allocation5 + $0x1d0] sm:$0xf]
    %v323 = vld [vmem:[#allocation5 + $0x1d4] sm:$0xf]
    %v324 = vld [vmem:[#allocation5 + $0x1d8] sm:$0xf]
    %v325 = vld [vmem:[#allocation5 + $0x1dc] sm:$0xf]
    %v326 = vld [vmem:[#allocation5 + $0x1e0] sm:$0xf]
    %v327 = vld [vmem:[#allocation5 + $0x1e4] sm:$0xf]
    %v328 = vld [vmem:[#allocation5 + $0x1e8] sm:$0xf]
    %v329 = vld [vmem:[#allocation5 + $0x1ec] sm:$0xf]
    %v330 = vld [vmem:[#allocation5 + $0x1f0] sm:$0xf]
    %v331 = vld [vmem:[#allocation5 + $0x1f4] sm:$0xf]
    %v332 = vld [vmem:[#allocation5 + $0x1f8] sm:$0xf]
    %v333 = vld [vmem:[#allocation5 + $0x1fc] sm:$0xf]
    %v334 = vld [vmem:[%s2] sm:$0x1]
    %v336 = vlaneseq
    %v337 = vshrl.u32 %v336, 7
    %v338 = vsub.s32 0, %v337
    %v339 = vrot.slane %v334, %v338
    %v469 = vunpack.c.l.b16 %v206
    %v470 = vunpack.c.l.b16 %v207
    %v471 = vunpack.c.l.b16 %v208
    %v472 = vunpack.c.l.b16 %v209
    %v473 = vunpack.c.l.b16 %v210
    %v474 = vunpack.c.l.b16 %v211
    %v475 = vunpack.c.l.b16 %v212
    %v476 = vunpack.c.l.b16 %v213
    %v477 = vunpack.c.l.b16 %v214
    %v478 = vunpack.c.l.b16 %v215
    %v479 = vunpack.c.l.b16 %v216
    %v480 = vunpack.c.l.b16 %v217
    %v481 = vunpack.c.l.b16 %v218
    %v482 = vunpack.c.l.b16 %v219
    %v483 = vunpack.c.l.b16 %v220
    %v484 = vunpack.c.l.b16 %v221
    %v485 = vunpack.c.l.b16 %v222
    %v486 = vunpack.c.l.b16 %v223
    %v487 = vunpack.c.l.b16 %v224
    %v488 = vunpack.c.l.b16 %v225
    %v489 = vunpack.c.l.b16 %v226
    %v490 = vunpack.c.l.b16 %v227
    %v491 = vunpack.c.l.b16 %v228
    %v492 = vunpack.c.l.b16 %v229
    %v493 = vunpack.c.l.b16 %v230
    %v494 = vunpack.c.l.b16 %v231
    %v495 = vunpack.c.l.b16 %v232
    %v496 = vunpack.c.l.b16 %v233
    %v497 = vunpack.c.l.b16 %v234
    %v498 = vunpack.c.l.b16 %v235
    %v499 = vunpack.c.l.b16 %v236
    %v500 = vunpack.c.l.b16 %v237
    %v501 = vunpack.c.l.b16 %v238
    %v502 = vunpack.c.l.b16 %v239
    %v503 = vunpack.c.l.b16 %v240
    %v504 = vunpack.c.l.b16 %v241
    %v505 = vunpack.c.l.b16 %v242
    %v506 = vunpack.c.l.b16 %v243
    %v507 = vunpack.c.l.b16 %v244
    %v508 = vunpack.c.l.b16 %v245
    %v509 = vunpack.c.l.b16 %v246
    %v510 = vunpack.c.l.b16 %v247
    %v511 = vunpack.c.l.b16 %v248
    %v512 = vunpack.c.l.b16 %v249
    %v513 = vunpack.c.l.b16 %v250
    %v514 = vunpack.c.l.b16 %v251
    %v515 = vunpack.c.l.b16 %v252
    %v516 = vunpack.c.l.b16 %v253
    %v517 = vunpack.c.l.b16 %v254
    %v518 = vunpack.c.l.b16 %v255
    %v519 = vunpack.c.l.b16 %v256
    %v520 = vunpack.c.l.b16 %v257
    %v521 = vunpack.c.l.b16 %v258
    %v522 = vunpack.c.l.b16 %v259
    %v523 = vunpack.c.l.b16 %v260
    %v524 = vunpack.c.l.b16 %v261
    %v525 = vunpack.c.l.b16 %v262
    %v526 = vunpack.c.l.b16 %v263
    %v527 = vunpack.c.l.b16 %v264
    %v528 = vunpack.c.l.b16 %v265
    %v529 = vunpack.c.l.b16 %v266
    %v530 = vunpack.c.l.b16 %v267
    %v531 = vunpack.c.l.b16 %v268
    %v532 = vunpack.c.l.b16 %v269
    %v533 = vunpack.c.l.b16 %v270
    %v534 = vunpack.c.l.b16 %v271
    %v535 = vunpack.c.l.b16 %v272
    %v536 = vunpack.c.l.b16 %v273
    %v537 = vunpack.c.l.b16 %v274
    %v538 = vunpack.c.l.b16 %v275
    %v539 = vunpack.c.l.b16 %v276
    %v540 = vunpack.c.l.b16 %v277
    %v541 = vunpack.c.l.b16 %v278
    %v542 = vunpack.c.l.b16 %v279
    %v543 = vunpack.c.l.b16 %v280
    %v544 = vunpack.c.l.b16 %v281
    %v545 = vunpack.c.l.b16 %v282
    %v546 = vunpack.c.l.b16 %v283
    %v547 = vunpack.c.l.b16 %v284
    %v548 = vunpack.c.l.b16 %v285
    %v549 = vunpack.c.l.b16 %v286
    %v550 = vunpack.c.l.b16 %v287
    %v551 = vunpack.c.l.b16 %v288
    %v552 = vunpack.c.l.b16 %v289
    %v553 = vunpack.c.l.b16 %v290
    %v554 = vunpack.c.l.b16 %v291
    %v555 = vunpack.c.l.b16 %v292
    %v556 = vunpack.c.l.b16 %v293
    %v557 = vunpack.c.l.b16 %v294
    %v558 = vunpack.c.l.b16 %v295
    %v559 = vunpack.c.l.b16 %v296
    %v560 = vunpack.c.l.b16 %v297
    %v561 = vunpack.c.l.b16 %v298
    %v562 = vunpack.c.l.b16 %v299
    %v563 = vunpack.c.l.b16 %v300
    %v564 = vunpack.c.l.b16 %v301
    %v565 = vunpack.c.l.b16 %v302
    %v566 = vunpack.c.l.b16 %v303
    %v567 = vunpack.c.l.b16 %v304
    %v568 = vunpack.c.l.b16 %v305
    %v569 = vunpack.c.l.b16 %v306
    %v570 = vunpack.c.l.b16 %v307
    %v571 = vunpack.c.l.b16 %v308
    %v572 = vunpack.c.l.b16 %v309
    %v573 = vunpack.c.l.b16 %v310
    %v574 = vunpack.c.l.b16 %v311
    %v575 = vunpack.c.l.b16 %v312
    %v576 = vunpack.c.l.b16 %v313
    %v577 = vunpack.c.l.b16 %v314
    %v578 = vunpack.c.l.b16 %v315
    %v579 = vunpack.c.l.b16 %v316
    %v580 = vunpack.c.l.b16 %v317
    %v581 = vunpack.c.l.b16 %v318
    %v582 = vunpack.c.l.b16 %v319
    %v583 = vunpack.c.l.b16 %v320
    %v584 = vunpack.c.l.b16 %v321
    %v585 = vunpack.c.l.b16 %v322
    %v586 = vunpack.c.l.b16 %v323
    %v587 = vunpack.c.l.b16 %v324
    %v588 = vunpack.c.l.b16 %v325
    %v589 = vunpack.c.l.b16 %v326
    %v590 = vunpack.c.l.b16 %v327
    %v591 = vunpack.c.l.b16 %v328
    %v592 = vunpack.c.l.b16 %v329
    %v593 = vunpack.c.l.b16 %v330
    %v594 = vunpack.c.l.b16 %v331
    %v595 = vunpack.c.l.b16 %v332
    %v596 = vunpack.c.l.b16 %v333
    %v597 = vpack.c.b16 %v470, %v469
    %v598 = vpack.c.b16 %v472, %v471
    %v599 = vpack.c.b16 %v474, %v473
    %v600 = vpack.c.b16 %v476, %v475
    %v601 = vpack.c.b16 %v478, %v477
    %v602 = vpack.c.b16 %v480, %v479
    %v603 = vpack.c.b16 %v482, %v481
    %v604 = vpack.c.b16 %v484, %v483
    %v605 = vpack.c.b16 %v486, %v485
    %v606 = vpack.c.b16 %v488, %v487
    %v607 = vpack.c.b16 %v490, %v489
    %v608 = vpack.c.b16 %v492, %v491
    %v609 = vpack.c.b16 %v494, %v493
    %v610 = vpack.c.b16 %v496, %v495
    %v611 = vpack.c.b16 %v498, %v497
    %v612 = vpack.c.b16 %v500, %v499
    %v613 = vpack.c.b16 %v502, %v501
    %v614 = vpack.c.b16 %v504, %v503
    %v615 = vpack.c.b16 %v506, %v505
    %v616 = vpack.c.b16 %v508, %v507
    %v617 = vpack.c.b16 %v510, %v509
    %v618 = vpack.c.b16 %v512, %v511
    %v619 = vpack.c.b16 %v514, %v513
    %v620 = vpack.c.b16 %v516, %v515
    %v621 = vpack.c.b16 %v518, %v517
    %v622 = vpack.c.b16 %v520, %v519
    %v623 = vpack.c.b16 %v522, %v521
    %v624 = vpack.c.b16 %v524, %v523
    %v625 = vpack.c.b16 %v526, %v525
    %v626 = vpack.c.b16 %v528, %v527
    %v627 = vpack.c.b16 %v530, %v529
    %v628 = vpack.c.b16 %v532, %v531
    %v629 = vpack.c.b16 %v534, %v533
    %v630 = vpack.c.b16 %v536, %v535
    %v631 = vpack.c.b16 %v538, %v537
    %v632 = vpack.c.b16 %v540, %v539
    %v633 = vpack.c.b16 %v542, %v541
    %v634 = vpack.c.b16 %v544, %v543
    %v635 = vpack.c.b16 %v546, %v545
    %v636 = vpack.c.b16 %v548, %v547
    %v637 = vpack.c.b16 %v550, %v549
    %v638 = vpack.c.b16 %v552, %v551
    %v639 = vpack.c.b16 %v554, %v553
    %v640 = vpack.c.b16 %v556, %v555
    %v641 = vpack.c.b16 %v558, %v557
    %v642 = vpack.c.b16 %v560, %v559
    %v643 = vpack.c.b16 %v562, %v561
    %v644 = vpack.c.b16 %v564, %v563
    %v645 = vpack.c.b16 %v566, %v565
    %v646 = vpack.c.b16 %v568, %v567
    %v647 = vpack.c.b16 %v570, %v569
    %v648 = vpack.c.b16 %v572, %v571
    %v649 = vpack.c.b16 %v574, %v573
    %v650 = vpack.c.b16 %v576, %v575
    %v651 = vpack.c.b16 %v578, %v577
    %v652 = vpack.c.b16 %v580, %v579
    %v653 = vpack.c.b16 %v582, %v581
    %v654 = vpack.c.b16 %v584, %v583
    %v655 = vpack.c.b16 %v586, %v585
    %v656 = vpack.c.b16 %v588, %v587
    %v657 = vpack.c.b16 %v590, %v589
    %v658 = vpack.c.b16 %v592, %v591
    %v659 = vpack.c.b16 %v594, %v593
    %v660 = vpack.c.b16 %v596, %v595
    %725 = vmatprep.subr.bf16.mxu0 0
    %726 = vmatpush1.bf16.msra.mxu0 %v604
    %727 = vmatprep.subr.bf16.mxu0 0
    %728 = vmatpush1.bf16.msra.mxu0 %v603
    %729 = vmatprep.subr.bf16.mxu0 0
    %730 = vmatpush1.bf16.msra.mxu0 %v602
    %731 = vmatprep.subr.bf16.mxu0 0
    %732 = vmatpush1.bf16.msra.mxu0 %v601
    %733 = vmatprep.subr.bf16.mxu0 0
    %734 = vmatpush1.bf16.msra.mxu0 %v600
    %735 = vmatprep.subr.bf16.mxu0 0
    %736 = vmatpush1.bf16.msra.mxu0 %v599
    %737 = vmatprep.subr.bf16.mxu0 0
    %738 = vmatpush1.bf16.msra.mxu0 %v598
    %739 = vmatprep.subr.bf16.mxu0 0
    %740 = vmatpush1.bf16.msra.mxu0 %v597
    %741 = vmatprep.subr.bf16.mxu0 0
    %742 = vmatpush2.bf16.msra.mxu0 %v612
    %743 = vmatprep.subr.bf16.mxu0 0
    %744 = vmatpush2.bf16.msra.mxu0 %v611
    %745 = vmatprep.subr.bf16.mxu0 0
    %746 = vmatpush2.bf16.msra.mxu0 %v610
    %747 = vmatprep.subr.bf16.mxu0 0
    %748 = vmatpush2.bf16.msra.mxu0 %v609
    %749 = vmatprep.subr.bf16.mxu0 0
    %750 = vmatpush2.bf16.msra.mxu0 %v608
    %751 = vmatprep.subr.bf16.mxu0 0
    %752 = vmatpush2.bf16.msra.mxu0 %v607
    %753 = vmatprep.subr.bf16.mxu0 0
    %754 = vmatpush2.bf16.msra.mxu0 %v606
    %755 = vmatprep.subr.bf16.mxu0 0
    %756 = vmatpush2.bf16.msra.mxu0 %v605
    %757 = vmatprep.mubr.bf16.mxu0 %v199
    %758 = vmatmul.mubr.bf16.gmra.mxu0 %v198
    %v759 = vpop.f32.mrf.mxu0
    %v760 = vadd.f32 %v339, %v759
    %v761 = vpop.f32.mrf.mxu0
    %v762 = vpop.f32.mrf.mxu0
    %v763 = vpop.f32.mrf.mxu0
    %764 = vdwg.mxu0
    %765 = vmatprep.subr.bf16.mxu0 0
    %766 = vmatpush1.bf16.msra.mxu0 %v620
    %767 = vmatprep.subr.bf16.mxu0 0
    %768 = vmatpush1.bf16.msra.mxu0 %v619
    %769 = vmatprep.subr.bf16.mxu0 0
    %770 = vmatpush1.bf16.msra.mxu0 %v618
    %771 = vmatprep.subr.bf16.mxu0 0
    %772 = vmatpush1.bf16.msra.mxu0 %v617
    %773 = vmatprep.subr.bf16.mxu0 0
    %774 = vmatpush1.bf16.msra.mxu0 %v616
    %775 = vmatprep.subr.bf16.mxu0 0
    %776 = vmatpush1.bf16.msra.mxu0 %v615
    %777 = vmatprep.subr.bf16.mxu0 0
    %778 = vmatpush1.bf16.msra.mxu0 %v614
    %779 = vmatprep.subr.bf16.mxu0 0
    %780 = vmatpush1.bf16.msra.mxu0 %v613
    %781 = vmatprep.subr.bf16.mxu0 0
    %782 = vmatpush2.bf16.msra.mxu0 %v628
    %783 = vmatprep.subr.bf16.mxu0 0
    %784 = vmatpush2.bf16.msra.mxu0 %v627
    %785 = vmatprep.subr.bf16.mxu0 0
    %786 = vmatpush2.bf16.msra.mxu0 %v626
    %787 = vmatprep.subr.bf16.mxu0 0
    %788 = vmatpush2.bf16.msra.mxu0 %v625
    %789 = vmatprep.subr.bf16.mxu0 0
    %790 = vmatpush2.bf16.msra.mxu0 %v624
    %791 = vmatprep.subr.bf16.mxu0 0
    %792 = vmatpush2.bf16.msra.mxu0 %v623
    %793 = vmatprep.subr.bf16.mxu0 0
    %794 = vmatpush2.bf16.msra.mxu0 %v622
    %795 = vmatprep.subr.bf16.mxu0 0
    %796 = vmatpush2.bf16.msra.mxu0 %v621
    %797 = vmatprep.mubr.bf16.mxu0 %v201
    %798 = vmatmul.mubr.bf16.gmra.mxu0 %v200
    %v799 = vpop.f32.mrf.mxu0
    %v800 = vadd.f32 %v760, %v799
    %v801 = vpop.f32.mrf.mxu0
    %v802 = vpop.f32.mrf.mxu0
    %v803 = vpop.f32.mrf.mxu0
    %804 = vdwg.mxu0
    %805 = vmatprep.subr.bf16.mxu0 0
    %806 = vmatpush1.bf16.msra.mxu0 %v636
    %807 = vmatprep.subr.bf16.mxu0 0
    %808 = vmatpush1.bf16.msra.mxu0 %v635
    %809 = vmatprep.subr.bf16.mxu0 0
    %810 = vmatpush1.bf16.msra.mxu0 %v634
    %811 = vmatprep.subr.bf16.mxu0 0
    %812 = vmatpush1.bf16.msra.mxu0 %v633
    %813 = vmatprep.subr.bf16.mxu0 0
    %814 = vmatpush1.bf16.msra.mxu0 %v632
    %815 = vmatprep.subr.bf16.mxu0 0
    %816 = vmatpush1.bf16.msra.mxu0 %v631
    %817 = vmatprep.subr.bf16.mxu0 0
    %818 = vmatpush1.bf16.msra.mxu0 %v630
    %819 = vmatprep.subr.bf16.mxu0 0
    %820 = vmatpush1.bf16.msra.mxu0 %v629
    %821 = vmatprep.subr.bf16.mxu0 0
    %822 = vmatpush2.bf16.msra.mxu0 %v644
    %823 = vmatprep.subr.bf16.mxu0 0
    %824 = vmatpush2.bf16.msra.mxu0 %v643
    %825 = vmatprep.subr.bf16.mxu0 0
    %826 = vmatpush2.bf16.msra.mxu0 %v642
    %827 = vmatprep.subr.bf16.mxu0 0
    %828 = vmatpush2.bf16.msra.mxu0 %v641
    %829 = vmatprep.subr.bf16.mxu0 0
    %830 = vmatpush2.bf16.msra.mxu0 %v640
    %831 = vmatprep.subr.bf16.mxu0 0
    %832 = vmatpush2.bf16.msra.mxu0 %v639
    %833 = vmatprep.subr.bf16.mxu0 0
    %834 = vmatpush2.bf16.msra.mxu0 %v638
    %835 = vmatprep.subr.bf16.mxu0 0
    %836 = vmatpush2.bf16.msra.mxu0 %v637
    %837 = vmatprep.mubr.bf16.mxu0 %v203
    %838 = vmatmul.mubr.bf16.gmra.mxu0 %v202
    %v839 = vpop.f32.mrf.mxu0
    %v840 = vadd.f32 %v800, %v839
    %v841 = vpop.f32.mrf.mxu0
    %v842 = vpop.f32.mrf.mxu0
    %v843 = vpop.f32.mrf.mxu0
    %844 = vdwg.mxu0
    %845 = vmatprep.subr.bf16.mxu0 0
    %846 = vmatpush1.bf16.msra.mxu0 %v652
    %847 = vmatprep.subr.bf16.mxu0 0
    %848 = vmatpush1.bf16.msra.mxu0 %v651
    %849 = vmatprep.subr.bf16.mxu0 0
    %850 = vmatpush1.bf16.msra.mxu0 %v650
    %851 = vmatprep.subr.bf16.mxu0 0
    %852 = vmatpush1.bf16.msra.mxu0 %v649
    %853 = vmatprep.subr.bf16.mxu0 0
    %854 = vmatpush1.bf16.msra.mxu0 %v648
    %855 = vmatprep.subr.bf16.mxu0 0
    %856 = vmatpush1.bf16.msra.mxu0 %v647
    %857 = vmatprep.subr.bf16.mxu0 0
    %858 = vmatpush1.bf16.msra.mxu0 %v646
    %859 = vmatprep.subr.bf16.mxu0 0
    %860 = vmatpush1.bf16.msra.mxu0 %v645
    %861 = vmatprep.subr.bf16.mxu0 0
    %862 = vmatpush2.bf16.msra.mxu0 %v660
    %863 = vmatprep.subr.bf16.mxu0 0
    %864 = vmatpush2.bf16.msra.mxu0 %v659
    %865 = vmatprep.subr.bf16.mxu0 0
    %866 = vmatpush2.bf16.msra.mxu0 %v658
    %867 = vmatprep.subr.bf16.mxu0 0
    %868 = vmatpush2.bf16.msra.mxu0 %v657
    %869 = vmatprep.subr.bf16.mxu0 0
    %870 = vmatpush2.bf16.msra.mxu0 %v656
    %871 = vmatprep.subr.bf16.mxu0 0
    %872 = vmatpush2.bf16.msra.mxu0 %v655
    %873 = vmatprep.subr.bf16.mxu0 0
    %874 = vmatpush2.bf16.msra.mxu0 %v654
    %875 = vmatprep.subr.bf16.mxu0 0
    %876 = vmatpush2.bf16.msra.mxu0 %v653
    %877 = vmatprep.mubr.bf16.mxu0 %v205
    %878 = vmatmul.mubr.bf16.gmra.mxu0 %v204
    %v879 = vpop.f32.mrf.mxu0
    %v880 = vadd.f32 %v840, %v879
    %v881 = vpop.f32.mrf.mxu0
    %v882 = vpop.f32.mrf.mxu0
    %v883 = vpop.f32.mrf.mxu0
    %884 = vdwg.mxu0
    %v885 = vmax.f32 %v880, 0.0
    %v886 = vpack.c.bf16 %v885, %v885
    %v887 = vld [vmem:[#allocation7] sm:$0xf]
    %v888 = vld [vmem:[#allocation7 + $0x4] sm:$0xf]
    %v889 = vld [vmem:[#allocation7 + $0x8] sm:$0xf]
    %v890 = vld [vmem:[#allocation7 + $0xc] sm:$0xf]
    %v891 = vld [vmem:[#allocation7 + $0x10] sm:$0xf]
    %v892 = vld [vmem:[#allocation7 + $0x14] sm:$0xf]
    %v893 = vld [vmem:[#allocation7 + $0x18] sm:$0xf]
    %v894 = vld [vmem:[#allocation7 + $0x1c] sm:$0xf]
    %v895 = vld [vmem:[#allocation7 + $0x20] sm:$0xf]
    %v896 = vld [vmem:[#allocation7 + $0x24] sm:$0xf]
    %v897 = vld [vmem:[#allocation7 + $0x28] sm:$0xf]
    %v898 = vld [vmem:[#allocation7 + $0x2c] sm:$0xf]
    %v899 = vld [vmem:[#allocation7 + $0x30] sm:$0xf]
    %v900 = vld [vmem:[#allocation7 + $0x34] sm:$0xf]
    %v901 = vld [vmem:[#allocation7 + $0x38] sm:$0xf]
    %v902 = vld [vmem:[#allocation7 + $0x3c] sm:$0xf]
    %v903 = vld [vmem:[%s4] sm:$0x1]
    %v905 = vlaneseq
    %v906 = vshrl.u32 %v905, 7
    %v907 = vsub.s32 0, %v906
    %v908 = vrot.slane %v903, %v907
    %v926 = vunpack.c.l.b16 %v887
    %v927 = vunpack.c.l.b16 %v888
    %v928 = vunpack.c.l.b16 %v889
    %v929 = vunpack.c.l.b16 %v890
    %v930 = vunpack.c.l.b16 %v891
    %v931 = vunpack.c.l.b16 %v892
    %v932 = vunpack.c.l.b16 %v893
    %v933 = vunpack.c.l.b16 %v894
    %v934 = vunpack.c.l.b16 %v895
    %v935 = vunpack.c.l.b16 %v896
    %v936 = vunpack.c.l.b16 %v897
    %v937 = vunpack.c.l.b16 %v898
    %v938 = vunpack.c.l.b16 %v899
    %v939 = vunpack.c.l.b16 %v900
    %v940 = vunpack.c.l.b16 %v901
    %v941 = vunpack.c.l.b16 %v902
    %v942 = vpack.c.b16 %v927, %v926
    %v943 = vpack.c.b16 %v929, %v928
    %v944 = vpack.c.b16 %v931, %v930
    %v945 = vpack.c.b16 %v933, %v932
    %v946 = vpack.c.b16 %v935, %v934
    %v947 = vpack.c.b16 %v937, %v936
    %v948 = vpack.c.b16 %v939, %v938
    %v949 = vpack.c.b16 %v941, %v940
    %958 = vmatprep.subr.bf16.mxu0 0
    %959 = vmatpush1.bf16.msra.mxu0 %v949
    %960 = vmatprep.subr.bf16.mxu0 0
    %961 = vmatpush1.bf16.msra.mxu0 %v948
    %962 = vmatprep.subr.bf16.mxu0 0
    %963 = vmatpush1.bf16.msra.mxu0 %v947
    %964 = vmatprep.subr.bf16.mxu0 0
    %965 = vmatpush1.bf16.msra.mxu0 %v946
    %966 = vmatprep.subr.bf16.mxu0 0
    %967 = vmatpush1.bf16.msra.mxu0 %v945
    %968 = vmatprep.subr.bf16.mxu0 0
    %969 = vmatpush1.bf16.msra.mxu0 %v944
    %970 = vmatprep.subr.bf16.mxu0 0
    %971 = vmatpush1.bf16.msra.mxu0 %v943
    %972 = vmatprep.subr.bf16.mxu0 0
    %973 = vmatpush1.bf16.msra.mxu0 %v942
    %974 = vmatprep.subr.bf16.mxu0 0
    %975 = vmatpush2.bf16.msra.mxu0 0
    %976 = vmatprep.subr.bf16.mxu0 0
    %977 = vmatpush2.bf16.msra.mxu0 0
    %978 = vmatprep.subr.bf16.mxu0 0
    %979 = vmatpush2.bf16.msra.mxu0 0
    %980 = vmatprep.subr.bf16.mxu0 0
    %981 = vmatpush2.bf16.msra.mxu0 0
    %982 = vmatprep.subr.bf16.mxu0 0
    %983 = vmatpush2.bf16.msra.mxu0 0
    %984 = vmatprep.subr.bf16.mxu0 0
    %985 = vmatpush2.bf16.msra.mxu0 0
    %986 = vmatprep.subr.bf16.mxu0 0
    %987 = vmatpush2.bf16.msra.mxu0 0
    %988 = vmatprep.subr.bf16.mxu0 0
    %989 = vmatpush2.bf16.msra.mxu0 0
    %990 = vmatprep.mubr.bf16.mxu0 0
    %991 = vmatmul.mubr.bf16.gmra.mxu0 %v886
    %v992 = vpop.f32.mrf.mxu0
    %v993 = vadd.f32 %v908, %v992
    %v994 = vpop.f32.mrf.mxu0
    %v995 = vpop.f32.mrf.mxu0
    %v996 = vpop.f32.mrf.mxu0
    %997 = vdwg.mxu0
    %v998 = vpack.c.bf16 %v993, %v993
    %v999 = vld [vmem:[#allocation8] sm:$0xf]
    %v1000 = vld [vmem:[#allocation8 + $0x4] sm:$0xf]
    %v1001 = vld [vmem:[#allocation8 + $0x8] sm:$0xf]
    %v1002 = vld [vmem:[#allocation8 + $0xc] sm:$0xf]
    %v1003 = vld [vmem:[#allocation8 + $0x10] sm:$0xf]
    %v1004 = vld [vmem:[#allocation8 + $0x14] sm:$0xf]
    %v1005 = vld [vmem:[#allocation8 + $0x18] sm:$0xf]
    %v1006 = vld [vmem:[#allocation8 + $0x1c] sm:$0xf]
    %v1007 = vld [vmem:[#allocation8 + $0x20] sm:$0xf]
    %v1008 = vld [vmem:[#allocation8 + $0x24] sm:$0xf]
    %v1009 = vld [vmem:[#allocation8 + $0x28] sm:$0xf]
    %v1010 = vld [vmem:[#allocation8 + $0x2c] sm:$0xf]
    %v1011 = vld [vmem:[#allocation8 + $0x30] sm:$0xf]
    %v1012 = vld [vmem:[#allocation8 + $0x34] sm:$0xf]
    %v1013 = vld [vmem:[#allocation8 + $0x38] sm:$0xf]
    %v1014 = vld [vmem:[#allocation8 + $0x3c] sm:$0xf]
    %v1015 = vld [vmem:[%s6] sm:$0x1]
    %v1017 = vlaneseq
    %v1018 = vshrl.u32 %v1017, 7
    %v1019 = vsub.s32 0, %v1018
    %v1020 = vrot.slane %v1015, %v1019
    %v1038 = vunpack.c.l.b16 %v999
    %v1039 = vunpack.c.l.b16 %v1000
    %v1040 = vunpack.c.l.b16 %v1001
    %v1041 = vunpack.c.l.b16 %v1002
    %v1042 = vunpack.c.l.b16 %v1003
    %v1043 = vunpack.c.l.b16 %v1004
    %v1044 = vunpack.c.l.b16 %v1005
    %v1045 = vunpack.c.l.b16 %v1006
    %v1046 = vunpack.c.l.b16 %v1007
    %v1047 = vunpack.c.l.b16 %v1008
    %v1048 = vunpack.c.l.b16 %v1009
    %v1049 = vunpack.c.l.b16 %v1010
    %v1050 = vunpack.c.l.b16 %v1011
    %v1051 = vunpack.c.l.b16 %v1012
    %v1052 = vunpack.c.l.b16 %v1013
    %v1053 = vunpack.c.l.b16 %v1014
    %v1054 = vpack.c.b16 %v1039, %v1038
    %v1055 = vpack.c.b16 %v1041, %v1040
    %v1056 = vpack.c.b16 %v1043, %v1042
    %v1057 = vpack.c.b16 %v1045, %v1044
    %v1058 = vpack.c.b16 %v1047, %v1046
    %v1059 = vpack.c.b16 %v1049, %v1048
    %v1060 = vpack.c.b16 %v1051, %v1050
    %v1061 = vpack.c.b16 %v1053, %v1052
    %1070 = vmatprep.subr.bf16.mxu0 0
    %1071 = vmatpush1.bf16.msra.mxu0 %v1061
    %1072 = vmatprep.subr.bf16.mxu0 0
    %1073 = vmatpush1.bf16.msra.mxu0 %v1060
    %1074 = vmatprep.subr.bf16.mxu0 0
    %1075 = vmatpush1.bf16.msra.mxu0 %v1059
    %1076 = vmatprep.subr.bf16.mxu0 0
    %1077 = vmatpush1.bf16.msra.mxu0 %v1058
    %1078 = vmatprep.subr.bf16.mxu0 0
    %1079 = vmatpush1.bf16.msra.mxu0 %v1057
    %1080 = vmatprep.subr.bf16.mxu0 0
    %1081 = vmatpush1.bf16.msra.mxu0 %v1056
    %1082 = vmatprep.subr.bf16.mxu0 0
    %1083 = vmatpush1.bf16.msra.mxu0 %v1055
    %1084 = vmatprep.subr.bf16.mxu0 0
    %1085 = vmatpush1.bf16.msra.mxu0 %v1054
    %1086 = vmatprep.subr.bf16.mxu0 0
    %1087 = vmatpush2.bf16.msra.mxu0 0
    %1088 = vmatprep.subr.bf16.mxu0 0
    %1089 = vmatpush2.bf16.msra.mxu0 0
    %1090 = vmatprep.subr.bf16.mxu0 0
    %1091 = vmatpush2.bf16.msra.mxu0 0
    %1092 = vmatprep.subr.bf16.mxu0 0
    %1093 = vmatpush2.bf16.msra.mxu0 0
    %1094 = vmatprep.subr.bf16.mxu0 0
    %1095 = vmatpush2.bf16.msra.mxu0 0
    %1096 = vmatprep.subr.bf16.mxu0 0
    %1097 = vmatpush2.bf16.msra.mxu0 0
    %1098 = vmatprep.subr.bf16.mxu0 0
    %1099 = vmatpush2.bf16.msra.mxu0 0
    %1100 = vmatprep.subr.bf16.mxu0 0
    %1101 = vmatpush2.bf16.msra.mxu0 0
    %1102 = vmatprep.mubr.bf16.mxu0 0
    %1103 = vmatmul.mubr.bf16.gmra.mxu0 %v998
    %v1104 = vpop.f32.mrf.mxu0
    %v1105 = vadd.f32 %v1020, %v1104
    %v1106 = vpop.f32.mrf.mxu0
    %v1107 = vpop.f32.mrf.mxu0
    %v1108 = vpop.f32.mrf.mxu0
    %1109 = vdwg.mxu0
    %v1110 = vmax.f32 %v1105, 0.0
    %v1111 = vpack.c.bf16 %v1110, %v1110
    %v1112 = vld [vmem:[#allocation10] sm:$0xff]
    %v1113 = vld [vmem:[#allocation10 + $0x8] sm:$0xff]
    %v1114 = vld [vmem:[#allocation10 + $0x10] sm:$0xff]
    %v1115 = vld [vmem:[#allocation10 + $0x18] sm:$0xff]
    %v1116 = vld [vmem:[#allocation10 + $0x20] sm:$0xff]
    %v1117 = vld [vmem:[#allocation10 + $0x28] sm:$0xff]
    %v1118 = vld [vmem:[#allocation10 + $0x30] sm:$0xff]
    %v1119 = vld [vmem:[#allocation10 + $0x38] sm:$0xff]
    %v1120 = vld [vmem:[#allocation10 + $0x40] sm:$0xff]
    %v1121 = vld [vmem:[#allocation10 + $0x48] sm:$0xff]
    %v1122 = vld [vmem:[#allocation10 + $0x50] sm:$0xff]
    %v1123 = vld [vmem:[#allocation10 + $0x58] sm:$0xff]
    %v1124 = vld [vmem:[#allocation10 + $0x60] sm:$0xff]
    %v1125 = vld [vmem:[#allocation10 + $0x68] sm:$0xff]
    %v1126 = vld [vmem:[#allocation10 + $0x70] sm:$0xff]
    %v1127 = vld [vmem:[#allocation10 + $0x78] sm:$0xff]
    %v1128 = vld [vmem:[#allocation10 + $0x80] sm:$0xff]
    %v1129 = vld [vmem:[#allocation10 + $0x88] sm:$0xff]
    %v1130 = vld [vmem:[#allocation10 + $0x90] sm:$0xff]
    %v1131 = vld [vmem:[#allocation10 + $0x98] sm:$0xff]
    %v1132 = vld [vmem:[#allocation10 + $0xa0] sm:$0xff]
    %v1133 = vld [vmem:[#allocation10 + $0xa8] sm:$0xff]
    %v1134 = vld [vmem:[#allocation10 + $0xb0] sm:$0xff]
    %v1135 = vld [vmem:[#allocation10 + $0xb8] sm:$0xff]
    %v1136 = vld [vmem:[#allocation10 + $0xc0] sm:$0xff]
    %v1137 = vld [vmem:[#allocation10 + $0xc8] sm:$0xff]
    %v1138 = vld [vmem:[#allocation10 + $0xd0] sm:$0xff]
    %v1139 = vld [vmem:[#allocation10 + $0xd8] sm:$0xff]
    %v1140 = vld [vmem:[#allocation10 + $0xe0] sm:$0xff]
    %v1141 = vld [vmem:[#allocation10 + $0xe8] sm:$0xff]
    %v1142 = vld [vmem:[#allocation10 + $0xf0] sm:$0xff]
    %v1143 = vld [vmem:[#allocation10 + $0xf8] sm:$0xff]
    %v1144 = vld [vmem:[#allocation10 + $0x100] sm:$0xff]
    %v1145 = vld [vmem:[#allocation10 + $0x108] sm:$0xff]
    %v1146 = vld [vmem:[#allocation10 + $0x110] sm:$0xff]
    %v1147 = vld [vmem:[#allocation10 + $0x118] sm:$0xff]
    %v1148 = vld [vmem:[#allocation10 + $0x120] sm:$0xff]
    %v1149 = vld [vmem:[#allocation10 + $0x128] sm:$0xff]
    %v1150 = vld [vmem:[#allocation10 + $0x130] sm:$0xff]
    %v1151 = vld [vmem:[#allocation10 + $0x138] sm:$0xff]
    %v1152 = vld [vmem:[#allocation10 + $0x140] sm:$0xff]
    %v1153 = vld [vmem:[#allocation10 + $0x148] sm:$0xff]
    %v1154 = vld [vmem:[#allocation10 + $0x150] sm:$0xff]
    %v1155 = vld [vmem:[#allocation10 + $0x158] sm:$0xff]
    %v1156 = vld [vmem:[#allocation10 + $0x160] sm:$0xff]
    %v1157 = vld [vmem:[#allocation10 + $0x168] sm:$0xff]
    %v1158 = vld [vmem:[#allocation10 + $0x170] sm:$0xff]
    %v1159 = vld [vmem:[#allocation10 + $0x178] sm:$0xff]
    %v1160 = vld [vmem:[#allocation10 + $0x180] sm:$0xff]
    %v1161 = vld [vmem:[#allocation10 + $0x188] sm:$0xff]
    %v1162 = vld [vmem:[#allocation10 + $0x190] sm:$0xff]
    %v1163 = vld [vmem:[#allocation10 + $0x198] sm:$0xff]
    %v1164 = vld [vmem:[#allocation10 + $0x1a0] sm:$0xff]
    %v1165 = vld [vmem:[#allocation10 + $0x1a8] sm:$0xff]
    %v1166 = vld [vmem:[#allocation10 + $0x1b0] sm:$0xff]
    %v1167 = vld [vmem:[#allocation10 + $0x1b8] sm:$0xff]
    %v1168 = vld [vmem:[#allocation10 + $0x1c0] sm:$0xff]
    %v1169 = vld [vmem:[#allocation10 + $0x1c8] sm:$0xff]
    %v1170 = vld [vmem:[#allocation10 + $0x1d0] sm:$0xff]
    %v1171 = vld [vmem:[#allocation10 + $0x1d8] sm:$0xff]
    %v1172 = vld [vmem:[#allocation10 + $0x1e0] sm:$0xff]
    %v1173 = vld [vmem:[#allocation10 + $0x1e8] sm:$0xff]
    %v1174 = vld [vmem:[#allocation10 + $0x1f0] sm:$0xff]
    %v1175 = vld [vmem:[#allocation10 + $0x1f8] sm:$0xff]
    %v1176 = vld [vmem:[%s8] sm:$0xff]
    %v1178 = vlaneseq
    %v1179 = vshrl.u32 %v1178, 7
    %v1180 = vsub.s32 0, %v1179
    %v1181 = vrot.slane %v1176, %v1180
    %v1182 = vlaneseq
    %v1183 = vshrl.u32 %v1182, 7
    %v1184 = vsub.s32 1, %v1183
    %v1185 = vrot.slane %v1176, %v1184
    %v1186 = vlaneseq
    %v1187 = vshrl.u32 %v1186, 7
    %v1188 = vsub.s32 2, %v1187
    %v1189 = vrot.slane %v1176, %v1188
    %v1190 = vlaneseq
    %v1191 = vshrl.u32 %v1190, 7
    %v1192 = vsub.s32 3, %v1191
    %v1193 = vrot.slane %v1176, %v1192
    %v1194 = vlaneseq
    %v1195 = vshrl.u32 %v1194, 7
    %v1196 = vsub.s32 4, %v1195
    %v1197 = vrot.slane %v1176, %v1196
    %v1198 = vlaneseq
    %v1199 = vshrl.u32 %v1198, 7
    %v1200 = vsub.s32 5, %v1199
    %v1201 = vrot.slane %v1176, %v1200
    %v1202 = vlaneseq
    %v1203 = vshrl.u32 %v1202, 7
    %v1204 = vsub.s32 6, %v1203
    %v1205 = vrot.slane %v1176, %v1204
    %v1206 = vlaneseq
    %v1207 = vshrl.u32 %v1206, 7
    %v1208 = vsub.s32 7, %v1207
    %v1209 = vrot.slane %v1176, %v1208
    %v1282 = vunpack.c.l.b16 %v1112
    %v1283 = vunpack.c.h.b16 %v1112
    %v1284 = vunpack.c.l.b16 %v1113
    %v1285 = vunpack.c.h.b16 %v1113
    %v1286 = vunpack.c.l.b16 %v1114
    %v1287 = vunpack.c.h.b16 %v1114
    %v1288 = vunpack.c.l.b16 %v1115
    %v1289 = vunpack.c.h.b16 %v1115
    %v1290 = vunpack.c.l.b16 %v1116
    %v1291 = vunpack.c.h.b16 %v1116
    %v1292 = vunpack.c.l.b16 %v1117
    %v1293 = vunpack.c.h.b16 %v1117
    %v1294 = vunpack.c.l.b16 %v1118
    %v1295 = vunpack.c.h.b16 %v1118
    %v1296 = vunpack.c.l.b16 %v1119
    %v1297 = vunpack.c.h.b16 %v1119
    %v1298 = vunpack.c.l.b16 %v1120
    %v1299 = vunpack.c.h.b16 %v1120
    %v1300 = vunpack.c.l.b16 %v1121
    %v1301 = vunpack.c.h.b16 %v1121
    %v1302 = vunpack.c.l.b16 %v1122
    %v1303 = vunpack.c.h.b16 %v1122
    %v1304 = vunpack.c.l.b16 %v1123
    %v1305 = vunpack.c.h.b16 %v1123
    %v1306 = vunpack.c.l.b16 %v1124
    %v1307 = vunpack.c.h.b16 %v1124
    %v1308 = vunpack.c.l.b16 %v1125
    %v1309 = vunpack.c.h.b16 %v1125
    %v1310 = vunpack.c.l.b16 %v1126
    %v1311 = vunpack.c.h.b16 %v1126
    %v1312 = vunpack.c.l.b16 %v1127
    %v1313 = vunpack.c.h.b16 %v1127
    %v1314 = vunpack.c.l.b16 %v1128
    %v1315 = vunpack.c.h.b16 %v1128
    %v1316 = vunpack.c.l.b16 %v1129
    %v1317 = vunpack.c.h.b16 %v1129
    %v1318 = vunpack.c.l.b16 %v1130
    %v1319 = vunpack.c.h.b16 %v1130
    %v1320 = vunpack.c.l.b16 %v1131
    %v1321 = vunpack.c.h.b16 %v1131
    %v1322 = vunpack.c.l.b16 %v1132
    %v1323 = vunpack.c.h.b16 %v1132
    %v1324 = vunpack.c.l.b16 %v1133
    %v1325 = vunpack.c.h.b16 %v1133
    %v1326 = vunpack.c.l.b16 %v1134
    %v1327 = vunpack.c.h.b16 %v1134
    %v1328 = vunpack.c.l.b16 %v1135
    %v1329 = vunpack.c.h.b16 %v1135
    %v1330 = vunpack.c.l.b16 %v1136
    %v1331 = vunpack.c.h.b16 %v1136
    %v1332 = vunpack.c.l.b16 %v1137
    %v1333 = vunpack.c.h.b16 %v1137
    %v1334 = vunpack.c.l.b16 %v1138
    %v1335 = vunpack.c.h.b16 %v1138
    %v1336 = vunpack.c.l.b16 %v1139
    %v1337 = vunpack.c.h.b16 %v1139
    %v1338 = vunpack.c.l.b16 %v1140
    %v1339 = vunpack.c.h.b16 %v1140
    %v1340 = vunpack.c.l.b16 %v1141
    %v1341 = vunpack.c.h.b16 %v1141
    %v1342 = vunpack.c.l.b16 %v1142
    %v1343 = vunpack.c.h.b16 %v1142
    %v1344 = vunpack.c.l.b16 %v1143
    %v1345 = vunpack.c.h.b16 %v1143
    %v1346 = vunpack.c.l.b16 %v1144
    %v1347 = vunpack.c.h.b16 %v1144
    %v1348 = vunpack.c.l.b16 %v1145
    %v1349 = vunpack.c.h.b16 %v1145
    %v1350 = vunpack.c.l.b16 %v1146
    %v1351 = vunpack.c.h.b16 %v1146
    %v1352 = vunpack.c.l.b16 %v1147
    %v1353 = vunpack.c.h.b16 %v1147
    %v1354 = vunpack.c.l.b16 %v1148
    %v1355 = vunpack.c.h.b16 %v1148
    %v1356 = vunpack.c.l.b16 %v1149
    %v1357 = vunpack.c.h.b16 %v1149
    %v1358 = vunpack.c.l.b16 %v1150
    %v1359 = vunpack.c.h.b16 %v1150
    %v1360 = vunpack.c.l.b16 %v1151
    %v1361 = vunpack.c.h.b16 %v1151
    %v1362 = vunpack.c.l.b16 %v1152
    %v1363 = vunpack.c.h.b16 %v1152
    %v1364 = vunpack.c.l.b16 %v1153
    %v1365 = vunpack.c.h.b16 %v1153
    %v1366 = vunpack.c.l.b16 %v1154
    %v1367 = vunpack.c.h.b16 %v1154
    %v1368 = vunpack.c.l.b16 %v1155
    %v1369 = vunpack.c.h.b16 %v1155
    %v1370 = vunpack.c.l.b16 %v1156
    %v1371 = vunpack.c.h.b16 %v1156
    %v1372 = vunpack.c.l.b16 %v1157
    %v1373 = vunpack.c.h.b16 %v1157
    %v1374 = vunpack.c.l.b16 %v1158
    %v1375 = vunpack.c.h.b16 %v1158
    %v1376 = vunpack.c.l.b16 %v1159
    %v1377 = vunpack.c.h.b16 %v1159
    %v1378 = vunpack.c.l.b16 %v1160
    %v1379 = vunpack.c.h.b16 %v1160
    %v1380 = vunpack.c.l.b16 %v1161
    %v1381 = vunpack.c.h.b16 %v1161
    %v1382 = vunpack.c.l.b16 %v1162
    %v1383 = vunpack.c.h.b16 %v1162
    %v1384 = vunpack.c.l.b16 %v1163
    %v1385 = vunpack.c.h.b16 %v1163
    %v1386 = vunpack.c.l.b16 %v1164
    %v1387 = vunpack.c.h.b16 %v1164
    %v1388 = vunpack.c.l.b16 %v1165
    %v1389 = vunpack.c.h.b16 %v1165
    %v1390 = vunpack.c.l.b16 %v1166
    %v1391 = vunpack.c.h.b16 %v1166
    %v1392 = vunpack.c.l.b16 %v1167
    %v1393 = vunpack.c.h.b16 %v1167
    %v1394 = vunpack.c.l.b16 %v1168
    %v1395 = vunpack.c.h.b16 %v1168
    %v1396 = vunpack.c.l.b16 %v1169
    %v1397 = vunpack.c.h.b16 %v1169
    %v1398 = vunpack.c.l.b16 %v1170
    %v1399 = vunpack.c.h.b16 %v1170
    %v1400 = vunpack.c.l.b16 %v1171
    %v1401 = vunpack.c.h.b16 %v1171
    %v1402 = vunpack.c.l.b16 %v1172
    %v1403 = vunpack.c.h.b16 %v1172
    %v1404 = vunpack.c.l.b16 %v1173
    %v1405 = vunpack.c.h.b16 %v1173
    %v1406 = vunpack.c.l.b16 %v1174
    %v1407 = vunpack.c.h.b16 %v1174
    %v1408 = vunpack.c.l.b16 %v1175
    %v1409 = vunpack.c.h.b16 %v1175
    %v1410 = vpack.c.b16 %v1290, %v1282
    %v1411 = vpack.c.b16 %v1291, %v1283
    %v1412 = vpack.c.b16 %v1292, %v1284
    %v1413 = vpack.c.b16 %v1293, %v1285
    %v1414 = vpack.c.b16 %v1294, %v1286
    %v1415 = vpack.c.b16 %v1295, %v1287
    %v1416 = vpack.c.b16 %v1296, %v1288
    %v1417 = vpack.c.b16 %v1297, %v1289
    %v1418 = vpack.c.b16 %v1306, %v1298
    %v1419 = vpack.c.b16 %v1307, %v1299
    %v1420 = vpack.c.b16 %v1308, %v1300
    %v1421 = vpack.c.b16 %v1309, %v1301
    %v1422 = vpack.c.b16 %v1310, %v1302
    %v1423 = vpack.c.b16 %v1311, %v1303
    %v1424 = vpack.c.b16 %v1312, %v1304
    %v1425 = vpack.c.b16 %v1313, %v1305
    %v1426 = vpack.c.b16 %v1322, %v1314
    %v1427 = vpack.c.b16 %v1323, %v1315
    %v1428 = vpack.c.b16 %v1324, %v1316
    %v1429 = vpack.c.b16 %v1325, %v1317
    %v1430 = vpack.c.b16 %v1326, %v1318
    %v1431 = vpack.c.b16 %v1327, %v1319
    %v1432 = vpack.c.b16 %v1328, %v1320
    %v1433 = vpack.c.b16 %v1329, %v1321
    %v1434 = vpack.c.b16 %v1338, %v1330
    %v1435 = vpack.c.b16 %v1339, %v1331
    %v1436 = vpack.c.b16 %v1340, %v1332
    %v1437 = vpack.c.b16 %v1341, %v1333
    %v1438 = vpack.c.b16 %v1342, %v1334
    %v1439 = vpack.c.b16 %v1343, %v1335
    %v1440 = vpack.c.b16 %v1344, %v1336
    %v1441 = vpack.c.b16 %v1345, %v1337
    %v1442 = vpack.c.b16 %v1354, %v1346
    %v1443 = vpack.c.b16 %v1355, %v1347
    %v1444 = vpack.c.b16 %v1356, %v1348
    %v1445 = vpack.c.b16 %v1357, %v1349
    %v1446 = vpack.c.b16 %v1358, %v1350
    %v1447 = vpack.c.b16 %v1359, %v1351
    %v1448 = vpack.c.b16 %v1360, %v1352
    %v1449 = vpack.c.b16 %v1361, %v1353
    %v1450 = vpack.c.b16 %v1370, %v1362
    %v1451 = vpack.c.b16 %v1371, %v1363
    %v1452 = vpack.c.b16 %v1372, %v1364
    %v1453 = vpack.c.b16 %v1373, %v1365
    %v1454 = vpack.c.b16 %v1374, %v1366
    %v1455 = vpack.c.b16 %v1375, %v1367
    %v1456 = vpack.c.b16 %v1376, %v1368
    %v1457 = vpack.c.b16 %v1377, %v1369
    %v1458 = vpack.c.b16 %v1386, %v1378
    %v1459 = vpack.c.b16 %v1387, %v1379
    %v1460 = vpack.c.b16 %v1388, %v1380
    %v1461 = vpack.c.b16 %v1389, %v1381
    %v1462 = vpack.c.b16 %v1390, %v1382
    %v1463 = vpack.c.b16 %v1391, %v1383
    %v1464 = vpack.c.b16 %v1392, %v1384
    %v1465 = vpack.c.b16 %v1393, %v1385
    %v1466 = vpack.c.b16 %v1402, %v1394
    %v1467 = vpack.c.b16 %v1403, %v1395
    %v1468 = vpack.c.b16 %v1404, %v1396
    %v1469 = vpack.c.b16 %v1405, %v1397
    %v1470 = vpack.c.b16 %v1406, %v1398
    %v1471 = vpack.c.b16 %v1407, %v1399
    %v1472 = vpack.c.b16 %v1408, %v1400
    %v1473 = vpack.c.b16 %v1409, %v1401
    %1538 = vmatprep.subr.bf16.mxu0 %v1467
    %1539 = vmatpush1.bf16.msra.mxu0 %v1466
    %1540 = vmatprep.subr.bf16.mxu0 %v1459
    %1541 = vmatpush1.bf16.msra.mxu0 %v1458
    %1542 = vmatprep.subr.bf16.mxu0 %v1451
    %1543 = vmatpush1.bf16.msra.mxu0 %v1450
    %1544 = vmatprep.subr.bf16.mxu0 %v1443
    %1545 = vmatpush1.bf16.msra.mxu0 %v1442
    %1546 = vmatprep.subr.bf16.mxu0 %v1435
    %1547 = vmatpush1.bf16.msra.mxu0 %v1434
    %1548 = vmatprep.subr.bf16.mxu0 %v1427
    %1549 = vmatpush1.bf16.msra.mxu0 %v1426
    %1550 = vmatprep.subr.bf16.mxu0 %v1419
    %1551 = vmatpush1.bf16.msra.mxu0 %v1418
    %1552 = vmatprep.subr.bf16.mxu0 %v1411
    %1553 = vmatpush1.bf16.msra.mxu0 %v1410
    %1554 = vmatprep.subr.bf16.mxu0 0
    %1555 = vmatpush2.bf16.msra.mxu0 0
    %1556 = vmatprep.subr.bf16.mxu0 0
    %1557 = vmatpush2.bf16.msra.mxu0 0
    %1558 = vmatprep.subr.bf16.mxu0 0
    %1559 = vmatpush2.bf16.msra.mxu0 0
    %1560 = vmatprep.subr.bf16.mxu0 0
    %1561 = vmatpush2.bf16.msra.mxu0 0
    %1562 = vmatprep.subr.bf16.mxu0 0
    %1563 = vmatpush2.bf16.msra.mxu0 0
    %1564 = vmatprep.subr.bf16.mxu0 0
    %1565 = vmatpush2.bf16.msra.mxu0 0
    %1566 = vmatprep.subr.bf16.mxu0 0
    %1567 = vmatpush2.bf16.msra.mxu0 0
    %1568 = vmatprep.subr.bf16.mxu0 0
    %1569 = vmatpush2.bf16.msra.mxu0 0
    %1570 = vmatprep.mubr.bf16.mxu0 0
    %1571 = vmatmul.mubr.bf16.gmra.mxu0 %v1111
    %v1572 = vpop.f32.mrf.mxu0
    %v1573 = vadd.f32 %v1181, %v1572
    %v1574 = vpop.f32.mrf.mxu0
    %v1575 = vadd.f32 %v1185, %v1574
    %v1576 = vpop.f32.mrf.mxu0
    %v1577 = vpop.f32.mrf.mxu0
    %1578 = vdwg.mxu0
    %1579 = vmatprep.subr.bf16.mxu0 %v1469
    %1580 = vmatpush1.bf16.msra.mxu0 %v1468
    %1581 = vmatprep.subr.bf16.mxu0 %v1461
    %1582 = vmatpush1.bf16.msra.mxu0 %v1460
    %1583 = vmatprep.subr.bf16.mxu0 %v1453
    %1584 = vmatpush1.bf16.msra.mxu0 %v1452
    %1585 = vmatprep.subr.bf16.mxu0 %v1445
    %1586 = vmatpush1.bf16.msra.mxu0 %v1444
    %1587 = vmatprep.subr.bf16.mxu0 %v1437
    %1588 = vmatpush1.bf16.msra.mxu0 %v1436
    %1589 = vmatprep.subr.bf16.mxu0 %v1429
    %1590 = vmatpush1.bf16.msra.mxu0 %v1428
    %1591 = vmatprep.subr.bf16.mxu0 %v1421
    %1592 = vmatpush1.bf16.msra.mxu0 %v1420
    %1593 = vmatprep.subr.bf16.mxu0 %v1413
    %1594 = vmatpush1.bf16.msra.mxu0 %v1412
    %1595 = vmatprep.subr.bf16.mxu0 0
    %1596 = vmatpush2.bf16.msra.mxu0 0
    %1597 = vmatprep.subr.bf16.mxu0 0
    %1598 = vmatpush2.bf16.msra.mxu0 0
    %1599 = vmatprep.subr.bf16.mxu0 0
    %1600 = vmatpush2.bf16.msra.mxu0 0
    %1601 = vmatprep.subr.bf16.mxu0 0
    %1602 = vmatpush2.bf16.msra.mxu0 0
    %1603 = vmatprep.subr.bf16.mxu0 0
    %1604 = vmatpush2.bf16.msra.mxu0 0
    %1605 = vmatprep.subr.bf16.mxu0 0
    %1606 = vmatpush2.bf16.msra.mxu0 0
    %1607 = vmatprep.subr.bf16.mxu0 0
    %1608 = vmatpush2.bf16.msra.mxu0 0
    %1609 = vmatprep.subr.bf16.mxu0 0
    %1610 = vmatpush2.bf16.msra.mxu0 0
    %1611 = vmatprep.mubr.bf16.mxu0 0
    %1612 = vmatmul.mubr.bf16.gmra.mxu0 %v1111
    %v1613 = vpop.f32.mrf.mxu0
    %v1614 = vadd.f32 %v1189, %v1613
    %v1615 = vpop.f32.mrf.mxu0
    %v1616 = vadd.f32 %v1193, %v1615
    %v1617 = vpop.f32.mrf.mxu0
    %v1618 = vpop.f32.mrf.mxu0
    %1619 = vdwg.mxu0
    %1620 = vmatprep.subr.bf16.mxu0 %v1471
    %1621 = vmatpush1.bf16.msra.mxu0 %v1470
    %1622 = vmatprep.subr.bf16.mxu0 %v1463
    %1623 = vmatpush1.bf16.msra.mxu0 %v1462
    %1624 = vmatprep.subr.bf16.mxu0 %v1455
    %1625 = vmatpush1.bf16.msra.mxu0 %v1454
    %1626 = vmatprep.subr.bf16.mxu0 %v1447
    %1627 = vmatpush1.bf16.msra.mxu0 %v1446
    %1628 = vmatprep.subr.bf16.mxu0 %v1439
    %1629 = vmatpush1.bf16.msra.mxu0 %v1438
    %1630 = vmatprep.subr.bf16.mxu0 %v1431
    %1631 = vmatpush1.bf16.msra.mxu0 %v1430
    %1632 = vmatprep.subr.bf16.mxu0 %v1423
    %1633 = vmatpush1.bf16.msra.mxu0 %v1422
    %1634 = vmatprep.subr.bf16.mxu0 %v1415
    %1635 = vmatpush1.bf16.msra.mxu0 %v1414
    %1636 = vmatprep.subr.bf16.mxu0 0
    %1637 = vmatpush2.bf16.msra.mxu0 0
    %1638 = vmatprep.subr.bf16.mxu0 0
    %1639 = vmatpush2.bf16.msra.mxu0 0
    %1640 = vmatprep.subr.bf16.mxu0 0
    %1641 = vmatpush2.bf16.msra.mxu0 0
    %1642 = vmatprep.subr.bf16.mxu0 0
    %1643 = vmatpush2.bf16.msra.mxu0 0
    %1644 = vmatprep.subr.bf16.mxu0 0
    %1645 = vmatpush2.bf16.msra.mxu0 0
    %1646 = vmatprep.subr.bf16.mxu0 0
    %1647 = vmatpush2.bf16.msra.mxu0 0
    %1648 = vmatprep.subr.bf16.mxu0 0
    %1649 = vmatpush2.bf16.msra.mxu0 0
    %1650 = vmatprep.subr.bf16.mxu0 0
    %1651 = vmatpush2.bf16.msra.mxu0 0
    %1652 = vmatprep.mubr.bf16.mxu0 0
    %1653 = vmatmul.mubr.bf16.gmra.mxu0 %v1111
    %v1654 = vpop.f32.mrf.mxu0
    %v1655 = vadd.f32 %v1197, %v1654
    %v1656 = vpop.f32.mrf.mxu0
    %v1657 = vadd.f32 %v1201, %v1656
    %v1658 = vpop.f32.mrf.mxu0
    %v1659 = vpop.f32.mrf.mxu0
    %1660 = vdwg.mxu0
    %1661 = vmatprep.subr.bf16.mxu0 %v1473
    %1662 = vmatpush1.bf16.msra.mxu0 %v1472
    %1663 = vmatprep.subr.bf16.mxu0 %v1465
    %1664 = vmatpush1.bf16.msra.mxu0 %v1464
    %1665 = vmatprep.subr.bf16.mxu0 %v1457
    %1666 = vmatpush1.bf16.msra.mxu0 %v1456
    %1667 = vmatprep.subr.bf16.mxu0 %v1449
    %1668 = vmatpush1.bf16.msra.mxu0 %v1448
    %1669 = vmatprep.subr.bf16.mxu0 %v1441
    %1670 = vmatpush1.bf16.msra.mxu0 %v1440
    %1671 = vmatprep.subr.bf16.mxu0 %v1433
    %1672 = vmatpush1.bf16.msra.mxu0 %v1432
    %1673 = vmatprep.subr.bf16.mxu0 %v1425
    %1674 = vmatpush1.bf16.msra.mxu0 %v1424
    %1675 = vmatprep.subr.bf16.mxu0 %v1417
    %1676 = vmatpush1.bf16.msra.mxu0 %v1416
    %1677 = vmatprep.subr.bf16.mxu0 0
    %1678 = vmatpush2.bf16.msra.mxu0 0
    %1679 = vmatprep.subr.bf16.mxu0 0
    %1680 = vmatpush2.bf16.msra.mxu0 0
    %1681 = vmatprep.subr.bf16.mxu0 0
    %1682 = vmatpush2.bf16.msra.mxu0 0
    %1683 = vmatprep.subr.bf16.mxu0 0
    %1684 = vmatpush2.bf16.msra.mxu0 0
    %1685 = vmatprep.subr.bf16.mxu0 0
    %1686 = vmatpush2.bf16.msra.mxu0 0
    %1687 = vmatprep.subr.bf16.mxu0 0
    %1688 = vmatpush2.bf16.msra.mxu0 0
    %1689 = vmatprep.subr.bf16.mxu0 0
    %1690 = vmatpush2.bf16.msra.mxu0 0
    %1691 = vmatprep.subr.bf16.mxu0 0
    %1692 = vmatpush2.bf16.msra.mxu0 0
    %1693 = vmatprep.mubr.bf16.mxu0 0
    %1694 = vmatmul.mubr.bf16.gmra.mxu0 %v1111
    %v1695 = vpop.f32.mrf.mxu0
    %v1696 = vadd.f32 %v1205, %v1695
    %v1697 = vpop.f32.mrf.mxu0
    %v1698 = vadd.f32 %v1209, %v1697
    %v1699 = vpop.f32.mrf.mxu0
    %v1700 = vpop.f32.mrf.mxu0
    %1701 = vdwg.mxu0
    %v1710 = vcombine.low %v1573, %v1575
    %v1711 = vcombine.high %v1573, %v1575
    %v1712 = vcombine.low %v1614, %v1616
    %v1713 = vcombine.high %v1614, %v1616
    %v1715 = vunpack.c.l.s4 1983009808
    %v1716 = vunpack.c.0.s8 %v1715
    %v1717 = vlaneseq
    %v1718 = vshrl.u32 %v1717, 7
    %v1719 = vsub.s32 %v1716, %v1718
    %v1720 = vrot.slane %v1710, %v1719
    %v1722 = vunpack.c.l.s4 1983009808
    %v1723 = vunpack.c.0.s8 %v1722
    %v1724 = vlaneseq
    %v1725 = vshrl.u32 %v1724, 7
    %v1726 = vsub.s32 %v1723, %v1725
    %v1727 = vrot.slane %v1711, %v1726
    %v1729 = vunpack.c.l.s4 1983009808
    %v1730 = vunpack.c.0.s8 %v1729
    %v1731 = vlaneseq
    %v1732 = vshrl.u32 %v1731, 7
    %v1733 = vsub.s32 %v1730, %v1732
    %v1734 = vrot.slane %v1712, %v1733
    %v1736 = vunpack.c.l.s4 1983009808
    %v1737 = vunpack.c.0.s8 %v1736
    %v1738 = vlaneseq
    %v1739 = vshrl.u32 %v1738, 7
    %v1740 = vsub.s32 %v1737, %v1739
    %v1741 = vrot.slane %v1713, %v1740
    %v1742 = vcombine.low %v1720, %v1734
    %v1743 = vcombine.high %v1720, %v1734
    %v1744 = vcombine.low %v1727, %v1741
    %v1745 = vcombine.high %v1727, %v1741
    %v1746 = vcombine.low %v1655, %v1657
    %v1747 = vcombine.high %v1655, %v1657
    %v1748 = vcombine.low %v1696, %v1698
    %v1749 = vcombine.high %v1696, %v1698
    %v1751 = vunpack.c.l.s4 1983009808
    %v1752 = vunpack.c.0.s8 %v1751
    %v1753 = vlaneseq
    %v1754 = vshrl.u32 %v1753, 7
    %v1755 = vsub.s32 %v1752, %v1754
    %v1756 = vrot.slane %v1746, %v1755
    %v1758 = vunpack.c.l.s4 1983009808
    %v1759 = vunpack.c.0.s8 %v1758
    %v1760 = vlaneseq
    %v1761 = vshrl.u32 %v1760, 7
    %v1762 = vsub.s32 %v1759, %v1761
    %v1763 = vrot.slane %v1747, %v1762
    %v1765 = vunpack.c.l.s4 1983009808
    %v1766 = vunpack.c.0.s8 %v1765
    %v1767 = vlaneseq
    %v1768 = vshrl.u32 %v1767, 7
    %v1769 = vsub.s32 %v1766, %v1768
    %v1770 = vrot.slane %v1748, %v1769
    %v1772 = vunpack.c.l.s4 1983009808
    %v1773 = vunpack.c.0.s8 %v1772
    %v1774 = vlaneseq
    %v1775 = vshrl.u32 %v1774, 7
    %v1776 = vsub.s32 %v1773, %v1775
    %v1777 = vrot.slane %v1749, %v1776
    %v1778 = vcombine.low %v1756, %v1770
    %v1779 = vcombine.high %v1756, %v1770
    %v1780 = vcombine.low %v1763, %v1777
    %v1781 = vcombine.high %v1763, %v1777
    %1790 = vst [vmem:[#allocation11] sm:$0xff] %v1742
    %1791 = vst [vmem:[#allocation11 + $0x8] sm:$0xff] %v1778
    %1792 = vst [vmem:[#allocation11 + $0x10] sm:$0xff] %v1743
    %1793 = vst [vmem:[#allocation11 + $0x18] sm:$0xff] %v1779
    %1794 = vst [vmem:[#allocation11 + $0x20] sm:$0xff] %v1744
    %1795 = vst [vmem:[#allocation11 + $0x28] sm:$0xff] %v1780
    %1796 = vst [vmem:[#allocation11 + $0x30] sm:$0xff] %v1745
    %1797 = vst [vmem:[#allocation11 + $0x38] sm:$0xff] %v1781
    // Predicated region
    $region58: #{tpu_custom_call.1} parent=1 // pred_check
      _
    $region59: #{tpu_custom_call.1} parent=1 // pred_check_branch
      %1799 = sbr.rel (0) target = $region61
    $region60: #{tpu_custom_call.1} parent=1 // pred_region
      %s1801 = ssub.s32 1024, 256
      %1802 = vsyncadd [#allocation4], %s1801
      %s1803 = sshll.u32 [#allocation11], 4
      %s1804 = int_to_ptr.vmem [resolvable:$true] %s1803
      %1809 = dma.vmem_to_hbm [thread:$0]  %s1804, 256, %s9, [#allocation4], 256, 256, 16
    $region61: #{tpu_custom_call.1} parent=1 // pred_fallthru
      _
    // Predicated region
    $region62: #{tpu_custom_call.1} parent=1 // pred_check
      _
    $region63: #{tpu_custom_call.1} parent=1 // pred_check_branch
      %1811 = sbr.rel (0) target = $region65
    $region64: #{tpu_custom_call.1} parent=1 // pred_region
      %1812 = dma.done [#allocation4], 1024
    $region65: #{tpu_custom_call.1} parent=1 // pred_fallthru
      _
    %1813 = vsyncpa [#allocation3], 1
    %1814 = vsyncpa [#allocation6], 1
    %1815 = vsyncpa [#allocation9], 1
    %1816 = vsyncpa [#allocation4], 1

</llo_original>
